<compile_context>
chip_gen: v5e
topology: v5e:2x2
jax: 0.10.0
libtpu: 0.0.40
codegen_flags: <defaults>
</compile_context>

<pallas_src>
import functools
import math

import jax
import jax.numpy as jnp
from jax.experimental import pallas as pl
from jax.experimental.pallas import tpu as pltpu


# -----------------------------------------------------------------------------
# Kernel
# -----------------------------------------------------------------------------
def _mlp_skip_kernel(plan, x_ref, *refs):
    """Fused MLP-with-skip forward on one batch tile.

    refs = [W_0, (Wskip_0), W_1, ..., W_out_row, biases_packed, out_ref]   (all VMEM)

    plan = (layer_plans, out_plan)
      layer_plans: tuple of (w_idx, bias_row, width, skip_w_idx, skip_bias_row);
                   skip_w_idx == -1 means no skip for that layer.
      out_plan:    (w_idx, bias_row)   -- head weight stored as a (1, H) row.
    """
    out_ref = refs[-1]
    b_ref = refs[-2]
    w = refs[:-2]

    layer_plans, (wo, obr) = plan

    x_bf = x_ref[...]                                # (TB, D) bf16 -- streamed tile
    cur = x_bf

    for (wi, br, width, swi, sbr) in layer_plans:
        # Linear + (folded) BatchNorm; bf16 operands, f32 accumulation on the MXU.
        acc = jnp.dot(cur, w[wi][...], preferred_element_type=jnp.float32)
        acc = acc + b_ref[br:br + 1, :width]         # (1, width) broadcast over batch tile
        h = jnp.maximum(acc, 0.0)                    # ReLU (f32); Dropout == identity in eval
        if swi >= 0:
            # Skip = Linear(original x), added AFTER the ReLU (matches the PyTorch module), so
            # it cannot be fused into the main matmul's contraction axis without changing math.
            skip = jnp.dot(x_bf, w[swi][...], preferred_element_type=jnp.float32)
            h = h + skip + b_ref[sbr:sbr + 1, :width]
        cur = h.astype(jnp.bfloat16)                 # carry inter-layer activation as bf16

    # Head: (1,H) x (TB,H) contracted on the last dims -> (1, TB) lane-dense row.
    logits = jax.lax.dot_general(
        w[wo][...], cur,
        dimension_numbers=(((1,), (1,)), ((), ())),
        preferred_element_type=jnp.float32)
    logits = logits + b_ref[obr:obr + 1, 0:1]        # scalar head bias, broadcast over lanes
    out_ref[...] = jax.nn.sigmoid(logits).astype(out_ref.dtype)   # classification head


# -----------------------------------------------------------------------------
# Wrapper
# -----------------------------------------------------------------------------
def feedforward_with_skip(x_bf16, weights, biases_packed, plan, *, tb=256):
    """x_bf16: (B, D) bf16.  weights: list of bf16 matrices.  biases_packed: (R, W) f32.

    Returns (B, 1) f32 sigmoid outputs.
    """
    B, D = x_bf16.shape
    assert B % tb == 0, "example keeps B a multiple of the batch tile"

    in_specs = [pl.BlockSpec((tb, D), lambda i: (i, 0))]          # batch-tiled bf16 activations
    for wmat in weights:
        # Weights are grid-invariant (constant index_map) and stay resident.  For much larger
        # hidden dims, add pipeline_mode=pl.Buffered(1) here and raise vmem_limit_bytes; at these
        # shapes resident weights are <0.5 MiB so the default buffering is harmless.
        in_specs.append(pl.BlockSpec(wmat.shape, lambda i: (0, 0)))
    in_specs.append(pl.BlockSpec(biases_packed.shape, lambda i: (0, 0)))

    # Lane-dense (1, tb) output blocks of a (1, B) row; reshaped to (B, 1) below.
    out_specs = pl.BlockSpec((1, tb), lambda i: (0, i))

    kernel = functools.partial(_mlp_skip_kernel, plan)
    out = pl.pallas_call(
        kernel,
        out_shape=jax.ShapeDtypeStruct((1, B), jnp.float32),
        grid=(B // tb,),
        in_specs=in_specs,
        out_specs=out_specs,
        compiler_params=pltpu.CompilerParams(
            dimension_semantics=("parallel",),        # shard batch tiles across TCs on v7x
            vmem_limit_bytes=32 * 1024 * 1024,
        ),
    )(x_bf16, *weights, biases_packed)
    return out.reshape(B, 1)


# -----------------------------------------------------------------------------
# Parameter init (mirrors PyTorch __init__ / _initialize_weights, eval-mode BN stats)
# -----------------------------------------------------------------------------
def init_raw_params(key, input_dim, hidden_dims):
    def xavier_uniform(k, fan_in, fan_out):
        bound = math.sqrt(6.0 / (fan_in + fan_out))
        return jax.random.uniform(k, (fan_in, fan_out), jnp.float32, -bound, bound)

    keys = jax.random.split(key, 2 * len(hidden_dims) + 1)
    ki = 0
    layers, skips = [], []
    prev = input_dim
    for hidden in hidden_dims:
        W = xavier_uniform(keys[ki], prev, hidden); ki += 1
        layers.append(dict(
            W=W, b=jnp.zeros((hidden,), jnp.float32),
            gamma=jnp.ones((hidden,), jnp.float32), beta=jnp.zeros((hidden,), jnp.float32),
            mean=jnp.zeros((hidden,), jnp.float32), var=jnp.ones((hidden,), jnp.float32)))
        if hidden == input_dim:
            Ws = xavier_uniform(keys[ki], input_dim, hidden); ki += 1
            skips.append((Ws, jnp.zeros((hidden,), jnp.float32)))
        else:
            ki += 1          # deterministic key consumption either way
            skips.append(None)
        prev = hidden
    W_out = xavier_uniform(keys[ki], prev, 1)
    return dict(layers=layers, skips=skips, W_out=W_out, b_out=jnp.zeros((1,), jnp.float32))


def fuse_params(raw, bn_eps=1e-5):
    """Fold BN into weights/bias, bf16-cast weights, store the head as a (1, H) row, and pack
    all bias vectors into one (8k, 128m) f32 array.  Returns (weights, biases_packed, plan)."""
    weights, bias_rows, layer_plans = [], [], []
    for i, layer in enumerate(raw["layers"]):
        scale = layer["gamma"] / jnp.sqrt(layer["var"] + bn_eps)          # (h,)
        shift = layer["beta"] - layer["mean"] * scale
        Wf = (layer["W"] * scale[None, :]).astype(jnp.bfloat16)
        bf = layer["b"] * scale + shift
        w_idx = len(weights); weights.append(Wf)
        b_row = len(bias_rows); bias_rows.append(bf)
        h = int(Wf.shape[1])
        if raw["skips"][i] is not None:
            Ws, bs = raw["skips"][i]
            sw_idx = len(weights); weights.append(Ws.astype(jnp.bfloat16))
            sb_row = len(bias_rows); bias_rows.append(bs)
        else:
            sw_idx, sb_row = -1, -1
        layer_plans.append((w_idx, b_row, h, sw_idx, sb_row))

    # Head as a (1, H) row so the kernel emits a lane-dense (1, TB) output.
    Wo_row = raw["W_out"].T.astype(jnp.bfloat16)                          # (1, prev)
    wo_idx = len(weights); weights.append(Wo_row)
    bo_row = len(bias_rows); bias_rows.append(raw["b_out"])               # (1,)
    out_plan = (wo_idx, bo_row)

    max_w = max(int(v.shape[0]) for v in bias_rows)
    max_w = ((max_w + 127) // 128) * 128
    r_pad = ((len(bias_rows) + 7) // 8) * 8
    packed = jnp.zeros((r_pad, max_w), jnp.float32)
    for r, vec in enumerate(bias_rows):
        packed = packed.at[r, :vec.shape[0]].set(vec)

    return weights, packed, (tuple(layer_plans), out_plan)


# -----------------------------------------------------------------------------
# Pure-JAX reference (original module eval-mode semantics, full f32) for sanity check
# -----------------------------------------------------------------------------
def reference_forward(x, raw, bn_eps=1e-5):
    cur = x
    for i, layer in enumerate(raw["layers"]):
        y = cur @ layer["W"] + layer["b"]
        y = (y - layer["mean"]) / jnp.sqrt(layer["var"] + bn_eps) * layer["gamma"] + layer["beta"]
        y = jnp.maximum(y, 0.0)
        if raw["skips"][i] is not None:
            Ws, bs = raw["skips"][i]
            y = y + x @ Ws + bs
        cur = y
    return jax.nn.sigmoid(cur @ raw["W_out"] + raw["b_out"])


# -----------------------------------------------------------------------------
# Main
# -----------------------------------------------------------------------------
if __name__ == "__main__":
    # Lane-aligned shapes; first & last hidden == input_dim exercise the Linear-skip branch.
    batch = 512
    input_dim = 128
    hidden_dims = [128, 256, 128]
    tb = 256                    # grid = 2 (even -> both v7x TensorCores get a tile)

    key = jax.random.PRNGKey(0)
    k_params, k_x = jax.random.split(key)

    raw = init_raw_params(k_params, input_dim, hidden_dims)
    weights, biases_packed, plan = fuse_params(raw)

    x = jax.random.normal(k_x, (batch, input_dim), jnp.float32)
    # Producer-side bf16 cast: the kernel streams bf16 activation tiles (half the HBM bytes).
    x_bf16 = x.astype(jnp.bfloat16)

    out = feedforward_with_skip(x_bf16, weights, biases_packed, plan, tb=tb)
    out = jax.block_until_ready(out)

    ref = reference_forward(x, raw)
    assert out.shape == (batch, 1), out.shape
    # bf16 weights + bf16 streamed/inter-layer activations vs. full-f32 reference -> loose tol.
    err = float(jnp.max(jnp.abs(out - ref)))
    assert err < 4e-2, err

    print("KERNEL_OK")
</pallas_src>

<mosaic_0001>
module attributes {stable_mosaic.version = 11 : i64} {
  func.func @_mlp_skip_kernel(%arg0: i32, %arg1: memref<256x128xbf16, #tpu.memory_space<vmem>>, %arg2: memref<128x128xbf16, #tpu.memory_space<vmem>>, %arg3: memref<128x128xbf16, #tpu.memory_space<vmem>>, %arg4: memref<128x256xbf16, #tpu.memory_space<vmem>>, %arg5: memref<256x128xbf16, #tpu.memory_space<vmem>>, %arg6: memref<128x128xbf16, #tpu.memory_space<vmem>>, %arg7: memref<1x128xbf16, #tpu.memory_space<vmem>>, %arg8: memref<8x256xf32, #tpu.memory_space<vmem>>, %arg9: memref<1x256xf32, #tpu.memory_space<vmem>>) attributes {dimension_semantics = [#tpu.dimension_semantics<parallel>], iteration_bounds = array<i64: 2>, scalar_prefetch = 0 : i64, scratch_operands = 0 : i64, tpu.core_type = #tpu.core_type<tc>, window_params = [{transform_indices = @transform_0, window_bounds = array<i64: 256, 128>}, {pipeline_mode = #tpu.pipeline_mode<synchronous>, transform_indices = @transform_1, window_bounds = array<i64: 128, 128>}, {pipeline_mode = #tpu.pipeline_mode<synchronous>, transform_indices = @transform_2, window_bounds = array<i64: 128, 128>}, {pipeline_mode = #tpu.pipeline_mode<synchronous>, transform_indices = @transform_3, window_bounds = array<i64: 128, 256>}, {pipeline_mode = #tpu.pipeline_mode<synchronous>, transform_indices = @transform_4, window_bounds = array<i64: 256, 128>}, {pipeline_mode = #tpu.pipeline_mode<synchronous>, transform_indices = @transform_5, window_bounds = array<i64: 128, 128>}, {pipeline_mode = #tpu.pipeline_mode<synchronous>, transform_indices = @transform_6, window_bounds = array<i64: 1, 128>}, {pipeline_mode = #tpu.pipeline_mode<synchronous>, transform_indices = @transform_7, window_bounds = array<i64: 8, 256>}, {transform_indices = @transform_8, window_bounds = array<i64: 1, 256>}]} {
    %c0 = arith.constant 0 : index
    %c0_0 = arith.constant 0 : index
    %0 = vector.load %arg1[%c0, %c0_0] : memref<256x128xbf16, #tpu.memory_space<vmem>>, vector<256x128xbf16>
    %c0_1 = arith.constant 0 : index
    %c0_2 = arith.constant 0 : index
    %1 = vector.load %arg2[%c0_1, %c0_2] : memref<128x128xbf16, #tpu.memory_space<vmem>>, vector<128x128xbf16>
    %cst = arith.constant dense<0.000000e+00> : vector<256x128xf32>
    %2 = tpu.matmul %0, %1, %cst {dimension_numbers = #tpu.dot_dimension_numbers<[1], [0], [0], [1], [0, 0, 1, 1], [], []>} : vector<256x128xbf16>, vector<128x128xbf16>, vector<256x128xf32> -> vector<256x128xf32>
    %c0_3 = arith.constant 0 : index
    %c0_4 = arith.constant 0 : index
    %3 = vector.load %arg8[%c0_3, %c0_4] : memref<8x256xf32, #tpu.memory_space<vmem>>, vector<1x128xf32>
    %4 = vector.broadcast %3 : vector<1x128xf32> to vector<256x128xf32>
    %5 = arith.addf %2, %4 : vector<256x128xf32>
    %cst_5 = arith.constant 0.000000e+00 : f32
    %6 = vector.broadcast %cst_5 : f32 to vector<256x128xf32>
    %7 = arith.maximumf %5, %6 : vector<256x128xf32>
    %c0_6 = arith.constant 0 : index
    %c0_7 = arith.constant 0 : index
    %8 = vector.load %arg3[%c0_6, %c0_7] : memref<128x128xbf16, #tpu.memory_space<vmem>>, vector<128x128xbf16>
    %cst_8 = arith.constant dense<0.000000e+00> : vector<256x128xf32>
    %9 = tpu.matmul %0, %8, %cst_8 {dimension_numbers = #tpu.dot_dimension_numbers<[1], [0], [0], [1], [0, 0, 1, 1], [], []>} : vector<256x128xbf16>, vector<128x128xbf16>, vector<256x128xf32> -> vector<256x128xf32>
    %10 = arith.addf %7, %9 : vector<256x128xf32>
    %c1 = arith.constant 1 : index
    %c0_9 = arith.constant 0 : index
    %11 = vector.load %arg8[%c1, %c0_9] : memref<8x256xf32, #tpu.memory_space<vmem>>, vector<1x128xf32>
    %12 = vector.broadcast %11 : vector<1x128xf32> to vector<256x128xf32>
    %13 = arith.addf %10, %12 : vector<256x128xf32>
    %14 = arith.truncf %13 : vector<256x128xf32> to vector<256x128xbf16>
    %c0_10 = arith.constant 0 : index
    %c0_11 = arith.constant 0 : index
    %15 = vector.load %arg4[%c0_10, %c0_11] : memref<128x256xbf16, #tpu.memory_space<vmem>>, vector<128x256xbf16>
    %cst_12 = arith.constant dense<0.000000e+00> : vector<256x256xf32>
    %16 = tpu.matmul %14, %15, %cst_12 {dimension_numbers = #tpu.dot_dimension_numbers<[1], [0], [0], [1], [0, 0, 1, 1], [], []>} : vector<256x128xbf16>, vector<128x256xbf16>, vector<256x256xf32> -> vector<256x256xf32>
    %c2 = arith.constant 2 : index
    %c0_13 = arith.constant 0 : index
    %17 = vector.load %arg8[%c2, %c0_13] : memref<8x256xf32, #tpu.memory_space<vmem>>, vector<1x256xf32>
    %18 = vector.broadcast %17 : vector<1x256xf32> to vector<256x256xf32>
    %19 = arith.addf %16, %18 : vector<256x256xf32>
    %cst_14 = arith.constant 0.000000e+00 : f32
    %20 = vector.broadcast %cst_14 : f32 to vector<256x256xf32>
    %21 = arith.maximumf %19, %20 : vector<256x256xf32>
    %22 = arith.truncf %21 : vector<256x256xf32> to vector<256x256xbf16>
    %c0_15 = arith.constant 0 : index
    %c0_16 = arith.constant 0 : index
    %23 = vector.load %arg5[%c0_15, %c0_16] : memref<256x128xbf16, #tpu.memory_space<vmem>>, vector<256x128xbf16>
    %cst_17 = arith.constant dense<0.000000e+00> : vector<256x128xf32>
    %24 = tpu.matmul %22, %23, %cst_17 {dimension_numbers = #tpu.dot_dimension_numbers<[1], [0], [0], [1], [0, 0, 1, 1], [], []>} : vector<256x256xbf16>, vector<256x128xbf16>, vector<256x128xf32> -> vector<256x128xf32>
    %c3 = arith.constant 3 : index
    %c0_18 = arith.constant 0 : index
    %25 = vector.load %arg8[%c3, %c0_18] : memref<8x256xf32, #tpu.memory_space<vmem>>, vector<1x128xf32>
    %26 = vector.broadcast %25 : vector<1x128xf32> to vector<256x128xf32>
    %27 = arith.addf %24, %26 : vector<256x128xf32>
    %cst_19 = arith.constant 0.000000e+00 : f32
    %28 = vector.broadcast %cst_19 : f32 to vector<256x128xf32>
    %29 = arith.maximumf %27, %28 : vector<256x128xf32>
    %c0_20 = arith.constant 0 : index
    %c0_21 = arith.constant 0 : index
    %30 = vector.load %arg6[%c0_20, %c0_21] : memref<128x128xbf16, #tpu.memory_space<vmem>>, vector<128x128xbf16>
    %cst_22 = arith.constant dense<0.000000e+00> : vector<256x128xf32>
    %31 = tpu.matmul %0, %30, %cst_22 {dimension_numbers = #tpu.dot_dimension_numbers<[1], [0], [0], [1], [0, 0, 1, 1], [], []>} : vector<256x128xbf16>, vector<128x128xbf16>, vector<256x128xf32> -> vector<256x128xf32>
    %32 = arith.addf %29, %31 : vector<256x128xf32>
    %c4 = arith.constant 4 : index
    %c0_23 = arith.constant 0 : index
    %33 = vector.load %arg8[%c4, %c0_23] : memref<8x256xf32, #tpu.memory_space<vmem>>, vector<1x128xf32>
    %34 = vector.broadcast %33 : vector<1x128xf32> to vector<256x128xf32>
    %35 = arith.addf %32, %34 : vector<256x128xf32>
    %36 = arith.truncf %35 : vector<256x128xf32> to vector<256x128xbf16>
    %c0_24 = arith.constant 0 : index
    %c0_25 = arith.constant 0 : index
    %37 = vector.load %arg7[%c0_24, %c0_25] : memref<1x128xbf16, #tpu.memory_space<vmem>>, vector<1x128xbf16>
    %cst_26 = arith.constant dense<0.000000e+00> : vector<1x256xf32>
    %38 = tpu.matmul %37, %36, %cst_26 {dimension_numbers = #tpu.dot_dimension_numbers<[1], [1], [0], [0], [0, 0, 1, 0], [], []>} : vector<1x128xbf16>, vector<256x128xbf16>, vector<1x256xf32> -> vector<1x256xf32>
    %c5 = arith.constant 5 : index
    %c0_27 = arith.constant 0 : index
    %39 = vector.load %arg8[%c5, %c0_27] : memref<8x256xf32, #tpu.memory_space<vmem>>, vector<1x1xf32>
    %40 = vector.broadcast %39 : vector<1x1xf32> to vector<1x256xf32>
    %41 = arith.addf %38, %40 : vector<1x256xf32>
    %42 = arith.negf %41 : vector<1x256xf32>
    %43 = math.exp %42 : vector<1x256xf32>
    %cst_28 = arith.constant 1.000000e+00 : f32
    %44 = vector.broadcast %cst_28 : f32 to vector<1x256xf32>
    %45 = arith.addf %44, %43 : vector<1x256xf32>
    %46 = arith.divf %44, %45 : vector<1x256xf32>
    %c0_29 = arith.constant 0 : index
    %c0_30 = arith.constant 0 : index
    %47 = vector.load %arg9[%c0_29, %c0_30] : memref<1x256xf32, #tpu.memory_space<vmem>>, vector<1x256xf32>
    tpu.vector_store %arg9[%c0_29, %c0_30], %46 {strides = array<i32>} : memref<1x256xf32, #tpu.memory_space<vmem>>, vector<1x256xf32>,
    return
  }
  func.func @transform_0(%arg0: i32) -> (i32, i32) {
    %c0_i32 = arith.constant 0 : i32
    %c0_i32_0 = arith.constant 0 : i32
    return %arg0, %c0_i32 : i32, i32
  }
  func.func @transform_1(%arg0: i32) -> (i32, i32) {
    %c0_i32 = arith.constant 0 : i32
    %c0_i32_0 = arith.constant 0 : i32
    %c0_i32_1 = arith.constant 0 : i32
    return %c0_i32, %c0_i32_0 : i32, i32
  }
  func.func @transform_2(%arg0: i32) -> (i32, i32) {
    %c0_i32 = arith.constant 0 : i32
    %c0_i32_0 = arith.constant 0 : i32
    %c0_i32_1 = arith.constant 0 : i32
    return %c0_i32, %c0_i32_0 : i32, i32
  }
  func.func @transform_3(%arg0: i32) -> (i32, i32) {
    %c0_i32 = arith.constant 0 : i32
    %c0_i32_0 = arith.constant 0 : i32
    %c0_i32_1 = arith.constant 0 : i32
    return %c0_i32, %c0_i32_0 : i32, i32
  }
  func.func @transform_4(%arg0: i32) -> (i32, i32) {
    %c0_i32 = arith.constant 0 : i32
    %c0_i32_0 = arith.constant 0 : i32
    %c0_i32_1 = arith.constant 0 : i32
    return %c0_i32, %c0_i32_0 : i32, i32
  }
  func.func @transform_5(%arg0: i32) -> (i32, i32) {
    %c0_i32 = arith.constant 0 : i32
    %c0_i32_0 = arith.constant 0 : i32
    %c0_i32_1 = arith.constant 0 : i32
    return %c0_i32, %c0_i32_0 : i32, i32
  }
  func.func @transform_6(%arg0: i32) -> (i32, i32) {
    %c0_i32 = arith.constant 0 : i32
    %c0_i32_0 = arith.constant 0 : i32
    %c0_i32_1 = arith.constant 0 : i32
    return %c0_i32, %c0_i32_0 : i32, i32
  }
  func.func @transform_7(%arg0: i32) -> (i32, i32) {
    %c0_i32 = arith.constant 0 : i32
    %c0_i32_0 = arith.constant 0 : i32
    %c0_i32_1 = arith.constant 0 : i32
    return %c0_i32, %c0_i32_0 : i32, i32
  }
  func.func @transform_8(%arg0: i32) -> (i32, i32) {
    %c0_i32 = arith.constant 0 : i32
    %c0_i32_0 = arith.constant 0 : i32
    return %c0_i32, %arg0 : i32, i32
  }
}

</mosaic_0001>

<llo_original>
// kernel: tpu_custom_call.1
$region0: #{tpu_custom_call.1}
  #allocation0 [shape = 'u32[]', space=smem, size = 0x4, offset = 0x4, fixed_abs, tag = 'smem constant byte address 0x4 - core index']
  #allocation1 [shape = 'u32[72,128]{1,0:T(1,128)}', space=vmem, size = 0x9000, scoped, tag = 'internal scratch']
  %s0 = inlined_call_operand.hbm [shape: bf16[512,128], index: 0, kind: input, shape index: {}]
  %s1 = inlined_call_operand.hbm [shape: bf16[128,128], index: 1, kind: input, shape index: {}]
  %s2 = inlined_call_operand.hbm [shape: bf16[128,128], index: 2, kind: input, shape index: {}]
  %s3 = inlined_call_operand.hbm [shape: bf16[128,256], index: 3, kind: input, shape index: {}]
  %s4 = inlined_call_operand.hbm [shape: bf16[256,128], index: 4, kind: input, shape index: {}]
  %s5 = inlined_call_operand.hbm [shape: bf16[128,128], index: 5, kind: input, shape index: {}]
  %s6 = inlined_call_operand.vmem [shape: bf16[1,128], index: 6, kind: input, shape index: {}]
  %s7 = inlined_call_operand.hbm [shape: f32[8,256], index: 7, kind: input, shape index: {}]
  %s8 = inlined_call_operand.hbm [shape: f32[1,512], index: 8, kind: output, shape index: {}]
  %s9 = sld [smem:[#allocation0]]
  $region93: #{tpu_custom_call.1} parent=0
    _
  %s11 = ssub.s32 1, %s9
  %s12 = scalar_select 0, %s11, %s9
  $region1: #{tpu_custom_call.1} parent=0
    #allocation2 [shape = 'u8[131072]{0}', space=vmem, size = 0x20000, scoped, tag = 'input window, operand 0']
    #allocation3 [shape = 's32[2]{0}', space=sflag, size = 0x8, scoped, tag = 'scoped memory for tpu_custom_call.1']
    #allocation4 [shape = 's32[2]{0}', space=sflag, size = 0x8, scoped, tag = 'scoped memory for tpu_custom_call.1']
    #allocation5 [shape = 'u8[32768]{0}', space=vmem, size = 0x8000, scoped, tag = 'input window, operand 1, single buffered']
    #allocation6 [shape = 's32[1]{0}', space=sflag, size = 0x4, scoped, tag = 'scoped memory for tpu_custom_call.1']
    #allocation7 [shape = 'u8[32768]{0}', space=vmem, size = 0x8000, scoped, tag = 'input window, operand 2, single buffered']
    #allocation8 [shape = 'u8[65536]{0}', space=vmem, size = 0x10000, scoped, tag = 'input window, operand 3, single buffered']
    #allocation9 [shape = 's32[1]{0}', space=sflag, size = 0x4, scoped, tag = 'scoped memory for tpu_custom_call.1']
    #allocation10 [shape = 'u8[65536]{0}', space=vmem, size = 0x10000, scoped, tag = 'input window, operand 4, single buffered']
    #allocation11 [shape = 'u8[32768]{0}', space=vmem, size = 0x8000, scoped, tag = 'input window, operand 5, single buffered']
    #allocation12 [shape = 's32[1]{0}', space=sflag, size = 0x4, scoped, tag = 'scoped memory for tpu_custom_call.1']
    #allocation13 [shape = 'u8[8192]{0}', space=vmem, size = 0x2000, scoped, tag = 'input window, operand 7, single buffered']
    #allocation14 [shape = 'u8[2048]{0}', space=vmem, size = 0x800, scoped, tag = 'output window, operand 0']
    %13 = vsyncpa [#allocation3], 0
    %s14 = scalar_lea.sflag [#allocation3], 1
    %15 = vsyncpa %s14, 0
    %16 = vsyncpa [#allocation6], 0
    %17 = vsyncpa [#allocation9], 0
    %18 = vsyncpa [#allocation12], 0
    %19 = vsyncpa [#allocation4], 0
    %s20 = scalar_lea.sflag [#allocation4], 1
    %21 = vsyncpa %s20, 0
    loop: start=0, step=1, limit=4
    $region2: #{tpu_custom_call.1} parent=1 // loop_pre_header
      _
    $region3: #{tpu_custom_call.1} parent=1 // loop_header
      %s23 = sphi 0, %s27
      %p24 = scmp.ge.s32.totalorder %s23, 4
      %s33 = sphi 0, %s35
      %s36 = sphi 0, %s33
      %s37 = sphi 0, %s36
      %s53 = sphi 0, %s37
      %s57 = sphi 0, %s57
      %s59 = sphi 0, %s57
      %s60 = sphi 0, %s59
      %s74 = sphi 0, %s60
      %s78 = sphi 0, %s78
      %s80 = sphi 0, %s78
      %s81 = sphi 0, %s80
      %s95 = sphi 0, %s81
      %s99 = sphi 0, %s99
      %s101 = sphi 0, %s99
      %s102 = sphi 0, %s101
      %s116 = sphi 0, %s102
      %s120 = sphi 0, %s120
      %s122 = sphi 0, %s120
      %s123 = sphi 0, %s122
      %s137 = sphi 0, %s123
      %s141 = sphi 0, %s141
      %s143 = sphi 0, %s141
      %s144 = sphi 0, %s143
      %s158 = sphi 0, %s144
      %s162 = sphi 0, %s162
      %s164 = sphi 0, %s162
      %s165 = sphi 0, %s164
      %s179 = sphi 0, %s165
      %s183 = sphi 0, %s183
      %s185 = sphi 0, %s183
      %s186 = sphi 0, %s185
      %s200 = sphi 0, %s186
      %s206 = sphi 0, %s208
      %s209 = sphi 0, %s206
      %s210 = sphi 0, %s209
      %s226 = sphi 0, %s210
    $region4: #{tpu_custom_call.1} parent=1 // loop_header_branch
      %26 = sbr.rel (%p24) target = $region8
    $region5: #{tpu_custom_call.1} parent=1 // loop_body
      %s28 = ssub.s32 %s23, 1
      %s29 = ssub.s32 %s23, 2
      %s30 = sadd.s32 %s23, 1
      %s31 = ssub.s32 %s23, %s30
      %p32 = scmp.eq.s32.totalorder %s31, 0
      %s34 = sadd.s32 %s33, 1
      %s35 = scalar_select %p32, %s33, %s34
      %p38 = pneg %p32
      %p39 = scmp.eq.s32.totalorder %s23, 1
      %p40 = por %p38, %p39
      %p41 = scmp.ne.s32.totalorder %s33, %s36
      %p42 = scmp.eq.s32.totalorder %s23, 0
      %p43 = por %p41, %p42
      %p44 = scmp.ne.s32.totalorder %s33, %s36
      %p45 = scmp.eq.s32.totalorder %s28, 1
      %p46 = por %p44, %p45
      %p47 = scmp.ne.s32.totalorder %s36, %s37
      %p48 = scmp.eq.s32.totalorder %s28, 0
      %p49 = por %p47, %p48
      %p50 = scmp.ne.s32.totalorder %s36, %s37
      %p51 = scmp.eq.s32.totalorder %s29, 1
      %p52 = por %p50, %p51
      %p54 = scmp.ne.s32.totalorder %s37, %s53
      %p55 = scmp.eq.s32.totalorder %s29, 0
      %p56 = por %p54, %p55
      %s58 = sadd.s32 %s57, 1
      %p61 = scmp.eq.s32.totalorder %s23, 1
      %p62 = scmp.ne.s32.totalorder %s57, %s59
      %p63 = scmp.eq.s32.totalorder %s23, 0
      %p64 = por %p62, %p63
      %p65 = scmp.ne.s32.totalorder %s57, %s59
      %p66 = scmp.eq.s32.totalorder %s28, 1
      %p67 = por %p65, %p66
      %p68 = scmp.ne.s32.totalorder %s59, %s60
      %p69 = scmp.eq.s32.totalorder %s28, 0
      %p70 = por %p68, %p69
      %p71 = scmp.ne.s32.totalorder %s59, %s60
      %p72 = scmp.eq.s32.totalorder %s29, 1
      %p73 = por %p71, %p72
      %p75 = scmp.ne.s32.totalorder %s60, %s74
      %p76 = scmp.eq.s32.totalorder %s29, 0
      %p77 = por %p75, %p76
      %s79 = sadd.s32 %s78, 1
      %p82 = scmp.eq.s32.totalorder %s23, 1
      %p83 = scmp.ne.s32.totalorder %s78, %s80
      %p84 = scmp.eq.s32.totalorder %s23, 0
      %p85 = por %p83, %p84
      %p86 = scmp.ne.s32.totalorder %s78, %s80
      %p87 = scmp.eq.s32.totalorder %s28, 1
      %p88 = por %p86, %p87
      %p89 = scmp.ne.s32.totalorder %s80, %s81
      %p90 = scmp.eq.s32.totalorder %s28, 0
      %p91 = por %p89, %p90
      %p92 = scmp.ne.s32.totalorder %s80, %s81
      %p93 = scmp.eq.s32.totalorder %s29, 1
      %p94 = por %p92, %p93
      %p96 = scmp.ne.s32.totalorder %s81, %s95
      %p97 = scmp.eq.s32.totalorder %s29, 0
      %p98 = por %p96, %p97
      %s100 = sadd.s32 %s99, 1
      %p103 = scmp.eq.s32.totalorder %s23, 1
      %p104 = scmp.ne.s32.totalorder %s99, %s101
      %p105 = scmp.eq.s32.totalorder %s23, 0
      %p106 = por %p104, %p105
      %p107 = scmp.ne.s32.totalorder %s99, %s101
      %p108 = scmp.eq.s32.totalorder %s28, 1
      %p109 = por %p107, %p108
      %p110 = scmp.ne.s32.totalorder %s101, %s102
      %p111 = scmp.eq.s32.totalorder %s28, 0
      %p112 = por %p110, %p111
      %p113 = scmp.ne.s32.totalorder %s101, %s102
      %p114 = scmp.eq.s32.totalorder %s29, 1
      %p115 = por %p113, %p114
      %p117 = scmp.ne.s32.totalorder %s102, %s116
      %p118 = scmp.eq.s32.totalorder %s29, 0
      %p119 = por %p117, %p118
      %s121 = sadd.s32 %s120, 1
      %p124 = scmp.eq.s32.totalorder %s23, 1
      %p125 = scmp.ne.s32.totalorder %s120, %s122
      %p126 = scmp.eq.s32.totalorder %s23, 0
      %p127 = por %p125, %p126
      %p128 = scmp.ne.s32.totalorder %s120, %s122
      %p129 = scmp.eq.s32.totalorder %s28, 1
      %p130 = por %p128, %p129
      %p131 = scmp.ne.s32.totalorder %s122, %s123
      %p132 = scmp.eq.s32.totalorder %s28, 0
      %p133 = por %p131, %p132
      %p134 = scmp.ne.s32.totalorder %s122, %s123
      %p135 = scmp.eq.s32.totalorder %s29, 1
      %p136 = por %p134, %p135
      %p138 = scmp.ne.s32.totalorder %s123, %s137
      %p139 = scmp.eq.s32.totalorder %s29, 0
      %p140 = por %p138, %p139
      %s142 = sadd.s32 %s141, 1
      %p145 = scmp.eq.s32.totalorder %s23, 1
      %p146 = scmp.ne.s32.totalorder %s141, %s143
      %p147 = scmp.eq.s32.totalorder %s23, 0
      %p148 = por %p146, %p147
      %p149 = scmp.ne.s32.totalorder %s141, %s143
      %p150 = scmp.eq.s32.totalorder %s28, 1
      %p151 = por %p149, %p150
      %p152 = scmp.ne.s32.totalorder %s143, %s144
      %p153 = scmp.eq.s32.totalorder %s28, 0
      %p154 = por %p152, %p153
      %p155 = scmp.ne.s32.totalorder %s143, %s144
      %p156 = scmp.eq.s32.totalorder %s29, 1
      %p157 = por %p155, %p156
      %p159 = scmp.ne.s32.totalorder %s144, %s158
      %p160 = scmp.eq.s32.totalorder %s29, 0
      %p161 = por %p159, %p160
      %s163 = sadd.s32 %s162, 1
      %p166 = scmp.eq.s32.totalorder %s23, 1
      %p167 = scmp.ne.s32.totalorder %s162, %s164
      %p168 = scmp.eq.s32.totalorder %s23, 0
      %p169 = por %p167, %p168
      %p170 = scmp.ne.s32.totalorder %s162, %s164
      %p171 = scmp.eq.s32.totalorder %s28, 1
      %p172 = por %p170, %p171
      %p173 = scmp.ne.s32.totalorder %s164, %s165
      %p174 = scmp.eq.s32.totalorder %s28, 0
      %p175 = por %p173, %p174
      %p176 = scmp.ne.s32.totalorder %s164, %s165
      %p177 = scmp.eq.s32.totalorder %s29, 1
      %p178 = por %p176, %p177
      %p180 = scmp.ne.s32.totalorder %s165, %s179
      %p181 = scmp.eq.s32.totalorder %s29, 0
      %p182 = por %p180, %p181
      %s184 = sadd.s32 %s183, 1
      %p187 = scmp.eq.s32.totalorder %s23, 1
      %p188 = scmp.ne.s32.totalorder %s183, %s185
      %p189 = scmp.eq.s32.totalorder %s23, 0
      %p190 = por %p188, %p189
      %p191 = scmp.ne.s32.totalorder %s183, %s185
      %p192 = scmp.eq.s32.totalorder %s28, 1
      %p193 = por %p191, %p192
      %p194 = scmp.ne.s32.totalorder %s185, %s186
      %p195 = scmp.eq.s32.totalorder %s28, 0
      %p196 = por %p194, %p195
      %p197 = scmp.ne.s32.totalorder %s185, %s186
      %p198 = scmp.eq.s32.totalorder %s29, 1
      %p199 = por %p197, %p198
      %p201 = scmp.ne.s32.totalorder %s186, %s200
      %p202 = scmp.eq.s32.totalorder %s29, 0
      %p203 = por %p201, %p202
      %s204 = ssub.s32 %s23, %s30
      %p205 = scmp.eq.s32.totalorder %s204, 0
      %s207 = sadd.s32 %s206, 1
      %s208 = scalar_select %p205, %s206, %s207
      %p211 = pneg %p205
      %p212 = scmp.eq.s32.totalorder %s23, 1
      %p213 = por %p211, %p212
      %p214 = scmp.ne.s32.totalorder %s206, %s209
      %p215 = scmp.eq.s32.totalorder %s23, 0
      %p216 = por %p214, %p215
      %p217 = scmp.ne.s32.totalorder %s206, %s209
      %p218 = scmp.eq.s32.totalorder %s28, 1
      %p219 = por %p217, %p218
      %p220 = scmp.ne.s32.totalorder %s209, %s210
      %p221 = scmp.eq.s32.totalorder %s28, 0
      %p222 = por %p220, %p221
      %p223 = scmp.ne.s32.totalorder %s209, %s210
      %p224 = scmp.eq.s32.totalorder %s29, 1
      %p225 = por %p223, %p224
      %p227 = scmp.ne.s32.totalorder %s210, %s226
      %p228 = scmp.eq.s32.totalorder %s29, 0
      %p229 = por %p227, %p228
      %p230 = scmp.le.s32.totalorder 1, %s23
      %p231 = scmp.lt.s32.totalorder %s23, 3
      %p232 = pnand %p230, %p231
      %p233 = pneg %p232
      // Predicated region
      $region9: #{tpu_custom_call.1} parent=5 // pred_check
        _
      $region10: #{tpu_custom_call.1} parent=5 // pred_check_branch
        %235 = sbr.rel (%p232) target = $region12
      $region11: #{tpu_custom_call.1} parent=5 // pred_region
        %s236 = ssub.s32 %s23, 1
        // Predicated region
        $region13: #{tpu_custom_call.1} parent=11 // pred_check
          %p237 = pneg %p70
        $region14: #{tpu_custom_call.1} parent=11 // pred_check_branch
          %239 = sbr.rel (%p237) target = $region16
        $region15: #{tpu_custom_call.1} parent=11 // pred_region
          %241 = vsyncadd [#allocation6], 0
          %s242 = sshll.u32 %s1, 4
          %s243 = int_to_ptr.hbm [resolvable:$true] %s242
          %s244 = sshll.u32 [#allocation5], 4
          %s245 = int_to_ptr.vmem [resolvable:$true] %s244
          %250 = dma.hbm_to_vmem [thread:$0]  %s243, 1024, %s245, [#allocation6], 64, 64, 4
        $region16: #{tpu_custom_call.1} parent=11 // pred_fallthru
          _
        // Predicated region
        $region17: #{tpu_custom_call.1} parent=11 // pred_check
          %p251 = pneg %p91
        $region18: #{tpu_custom_call.1} parent=11 // pred_check_branch
          %253 = sbr.rel (%p251) target = $region20
        $region19: #{tpu_custom_call.1} parent=11 // pred_region
          %255 = vsyncadd [#allocation6], 0
          %s256 = sshll.u32 %s2, 4
          %s257 = int_to_ptr.hbm [resolvable:$true] %s256
          %s258 = sshll.u32 [#allocation7], 4
          %s259 = int_to_ptr.vmem [resolvable:$true] %s258
          %264 = dma.hbm_to_vmem [thread:$0]  %s257, 1024, %s259, [#allocation6], 64, 64, 4
        $region20: #{tpu_custom_call.1} parent=11 // pred_fallthru
          _
        // Predicated region
        $region21: #{tpu_custom_call.1} parent=11 // pred_check
          %p265 = pneg %p112
        $region22: #{tpu_custom_call.1} parent=11 // pred_check_branch
          %267 = sbr.rel (%p265) target = $region24
        $region23: #{tpu_custom_call.1} parent=11 // pred_region
          %269 = vsyncadd [#allocation9], 0
          %s270 = sshll.u32 %s3, 4
          %s271 = int_to_ptr.hbm [resolvable:$true] %s270
          %s272 = sshll.u32 [#allocation8], 4
          %s273 = int_to_ptr.vmem [resolvable:$true] %s272
          %278 = dma.hbm_to_vmem [thread:$0]  %s271, 2048, %s273, [#allocation9], 128, 128, 8
        $region24: #{tpu_custom_call.1} parent=11 // pred_fallthru
          _
        // Predicated region
        $region25: #{tpu_custom_call.1} parent=11 // pred_check
          %p279 = pneg %p133
        $region26: #{tpu_custom_call.1} parent=11 // pred_check_branch
          %281 = sbr.rel (%p279) target = $region28
        $region27: #{tpu_custom_call.1} parent=11 // pred_region
          %283 = vsyncadd [#allocation9], 0
          %s284 = sshll.u32 %s4, 4
          %s285 = int_to_ptr.hbm [resolvable:$true] %s284
          %s286 = sshll.u32 [#allocation10], 4
          %s287 = int_to_ptr.vmem [resolvable:$true] %s286
          %292 = dma.hbm_to_vmem [thread:$0]  %s285, 2048, %s287, [#allocation9], 64, 64, 4
        $region28: #{tpu_custom_call.1} parent=11 // pred_fallthru
          _
        // Predicated region
        $region29: #{tpu_custom_call.1} parent=11 // pred_check
          %p293 = pneg %p154
        $region30: #{tpu_custom_call.1} parent=11 // pred_check_branch
          %295 = sbr.rel (%p293) target = $region32
        $region31: #{tpu_custom_call.1} parent=11 // pred_region
          %297 = vsyncadd [#allocation12], 0
          %s298 = sshll.u32 %s5, 4
          %s299 = int_to_ptr.hbm [resolvable:$true] %s298
          %s300 = sshll.u32 [#allocation11], 4
          %s301 = int_to_ptr.vmem [resolvable:$true] %s300
          %306 = dma.hbm_to_vmem [thread:$0]  %s299, 1024, %s301, [#allocation12], 64, 64, 4
        $region32: #{tpu_custom_call.1} parent=11 // pred_fallthru
          _
        // Predicated region
        $region33: #{tpu_custom_call.1} parent=11 // pred_check
          %p307 = pneg %p175
        $region34: #{tpu_custom_call.1} parent=11 // pred_check_branch
          %309 = sbr.rel (%p307) target = $region36
        $region35: #{tpu_custom_call.1} parent=11 // pred_region
          _
        $region36: #{tpu_custom_call.1} parent=11 // pred_fallthru
          _
        // Predicated region
        $region37: #{tpu_custom_call.1} parent=11 // pred_check
          %p310 = pneg %p196
        $region38: #{tpu_custom_call.1} parent=11 // pred_check_branch
          %312 = sbr.rel (%p310) target = $region40
        $region39: #{tpu_custom_call.1} parent=11 // pred_region
          %314 = vsyncadd [#allocation12], 0
          %s316 = sshll.u32 %s7, 4
          %s317 = int_to_ptr.hbm [resolvable:$true] %s316
          %s318 = sshll.u32 [#allocation13], 4
          %s319 = int_to_ptr.vmem [resolvable:$true] %s318
          %321 = dma.hbm_to_vmem [thread:$0]  %s317, 256, %s319, [#allocation12]
        $region40: #{tpu_custom_call.1} parent=11 // pred_fallthru
          _
      $region12: #{tpu_custom_call.1} parent=5 // pred_fallthru
        _
      %p322 = scmp.lt.s32.totalorder %s23, 2
      // Predicated region
      $region41: #{tpu_custom_call.1} parent=5 // pred_check
        %p323 = pneg %p322
      $region42: #{tpu_custom_call.1} parent=5 // pred_check_branch
        %325 = sbr.rel (%p323) target = $region44
      $region43: #{tpu_custom_call.1} parent=5 // pred_region
        // Predicated region
        $region45: #{tpu_custom_call.1} parent=43 // pred_check
          %p326 = pneg %p43
        $region46: #{tpu_custom_call.1} parent=43 // pred_check_branch
          %328 = sbr.rel (%p326) target = $region48
        $region47: #{tpu_custom_call.1} parent=43 // pred_region
          %s329 = sand.u32 %s33, 1
          %s330 = scalar_lea.sflag [#allocation3], %s329
          %s331 = sand.u32 %s33, 1
          %s332 = smul.addr %s331, 128
          %s333 = scalar_lea.vmem [#allocation2], %s332
          %s334 = smul.u32 32, %s23
          %336 = vsyncadd %s330, 0
          %s337 = smul.addr %s334, 4
          %s338 = scalar_lea.hbm %s0, %s337
          %s339 = sshll.u32 %s338, 4
          %s340 = int_to_ptr.hbm [resolvable:$true] %s339
          %s341 = sshll.u32 %s333, 4
          %s342 = int_to_ptr.vmem [resolvable:$true] %s341
          %347 = dma.hbm_to_vmem [thread:$0]  %s340, 2048, %s342, %s330, 64, 64, 4
        $region48: #{tpu_custom_call.1} parent=43 // pred_fallthru
          _
      $region44: #{tpu_custom_call.1} parent=5 // pred_fallthru
        _
      %p348 = scmp.le.s32.totalorder 1, %s23
      %p349 = scmp.lt.s32.totalorder %s23, 3
      %p350 = pnand %p348, %p349
      %p351 = pneg %p350
      // Predicated region
      $region49: #{tpu_custom_call.1} parent=5 // pred_check
        _
      $region50: #{tpu_custom_call.1} parent=5 // pred_check_branch
        %353 = sbr.rel (%p350) target = $region52
      $region51: #{tpu_custom_call.1} parent=5 // pred_region
        %s354 = ssub.s32 %s23, 1
        %s355 = sand.u32 %s36, 1
        %s356 = scalar_lea.sflag [#allocation3], %s355
        %s357 = sand.u32 %s36, 1
        %s358 = smul.addr %s357, 128
        %s359 = scalar_lea.vmem [#allocation2], %s358
        // Predicated region
        $region53: #{tpu_custom_call.1} parent=51 // pred_check
          %p360 = pneg %p49
        $region54: #{tpu_custom_call.1} parent=51 // pred_check_branch
          %362 = sbr.rel (%p360) target = $region56
        $region55: #{tpu_custom_call.1} parent=51 // pred_region
          %364 = dma.done %s356, 2048
        $region56: #{tpu_custom_call.1} parent=51 // pred_fallthru
          _
        // Predicated region
        $region57: #{tpu_custom_call.1} parent=51 // pred_check
          %p365 = pneg %p70
        $region58: #{tpu_custom_call.1} parent=51 // pred_check_branch
          %367 = sbr.rel (%p365) target = $region60
        $region59: #{tpu_custom_call.1} parent=51 // pred_region
          %369 = dma.done [#allocation6], 1024
        $region60: #{tpu_custom_call.1} parent=51 // pred_fallthru
          _
        // Predicated region
        $region61: #{tpu_custom_call.1} parent=51 // pred_check
          %p370 = pneg %p91
        $region62: #{tpu_custom_call.1} parent=51 // pred_check_branch
          %372 = sbr.rel (%p370) target = $region64
        $region63: #{tpu_custom_call.1} parent=51 // pred_region
          %374 = dma.done [#allocation6], 1024
        $region64: #{tpu_custom_call.1} parent=51 // pred_fallthru
          _
        // Predicated region
        $region65: #{tpu_custom_call.1} parent=51 // pred_check
          %p375 = pneg %p112
        $region66: #{tpu_custom_call.1} parent=51 // pred_check_branch
          %377 = sbr.rel (%p375) target = $region68
        $region67: #{tpu_custom_call.1} parent=51 // pred_region
          %379 = dma.done [#allocation9], 2048
        $region68: #{tpu_custom_call.1} parent=51 // pred_fallthru
          _
        // Predicated region
        $region69: #{tpu_custom_call.1} parent=51 // pred_check
          %p380 = pneg %p133
        $region70: #{tpu_custom_call.1} parent=51 // pred_check_branch
          %382 = sbr.rel (%p380) target = $region72
        $region71: #{tpu_custom_call.1} parent=51 // pred_region
          %384 = dma.done [#allocation9], 2048
        $region72: #{tpu_custom_call.1} parent=51 // pred_fallthru
          _
        // Predicated region
        $region73: #{tpu_custom_call.1} parent=51 // pred_check
          %p385 = pneg %p154
        $region74: #{tpu_custom_call.1} parent=51 // pred_check_branch
          %387 = sbr.rel (%p385) target = $region76
        $region75: #{tpu_custom_call.1} parent=51 // pred_region
          %389 = dma.done [#allocation12], 1024
        $region76: #{tpu_custom_call.1} parent=51 // pred_fallthru
          _
        // Predicated region
        $region77: #{tpu_custom_call.1} parent=51 // pred_check
          %p390 = pneg %p196
        $region78: #{tpu_custom_call.1} parent=51 // pred_check_branch
          %392 = sbr.rel (%p390) target = $region80
        $region79: #{tpu_custom_call.1} parent=51 // pred_region
          %394 = dma.done [#allocation12], 256
        $region80: #{tpu_custom_call.1} parent=51 // pred_fallthru
          _
        %s395 = sand.u32 %s36, 1
        %s396 = scalar_lea.sflag [#allocation3], %s395
        %s397 = sand.u32 %s36, 1
        %s398 = smul.addr %s397, 128
        %s399 = scalar_lea.vmem [#allocation2], %s398
        %p400 = pneg %p49
        %p401 = pneg %p46
        %p402 = pneg %p70
        %p403 = pneg %p67
        %p404 = pneg %p91
        %p405 = pneg %p88
        %p406 = pneg %p112
        %p407 = pneg %p109
        %p408 = pneg %p133
        %p409 = pneg %p130
        %p410 = pneg %p154
        %p411 = pneg %p151
        %p412 = pneg %p175
        %p413 = pneg %p172
        %p414 = pneg %p196
        %p415 = pneg %p193
        %p416 = pneg %p222
        %p417 = pneg %p219
        %s418 = sand.u32 %s209, 1
        %s419 = scalar_lea.sflag [#allocation4], %s418
        %s420 = sand.u32 %s209, 1
        %s421 = smul.addr %s420, 2
        %s422 = scalar_lea.vmem [#allocation14], %s421
        %s423 = smul.u32 32, %s28
        %s424 = smul.u32 2, %s28
        %v425 = vld [vmem:[%s359] sm:$0xf]
        %v426 = vld [vmem:[%s359 + $0x4] sm:$0xf]
        %v427 = vld [vmem:[%s359 + $0x8] sm:$0xf]
        %v428 = vld [vmem:[%s359 + $0xc] sm:$0xf]
        %v429 = vld [vmem:[%s359 + $0x10] sm:$0xf]
        %v430 = vld [vmem:[%s359 + $0x14] sm:$0xf]
        %v431 = vld [vmem:[%s359 + $0x18] sm:$0xf]
        %v432 = vld [vmem:[%s359 + $0x1c] sm:$0xf]
        %v433 = vld [vmem:[%s359 + $0x20] sm:$0xf]
        %v434 = vld [vmem:[%s359 + $0x24] sm:$0xf]
        %v435 = vld [vmem:[%s359 + $0x28] sm:$0xf]
        %v436 = vld [vmem:[%s359 + $0x2c] sm:$0xf]
        %v437 = vld [vmem:[%s359 + $0x30] sm:$0xf]
        %v438 = vld [vmem:[%s359 + $0x34] sm:$0xf]
        %v439 = vld [vmem:[%s359 + $0x38] sm:$0xf]
        %v440 = vld [vmem:[%s359 + $0x3c] sm:$0xf]
        %v441 = vld [vmem:[%s359 + $0x40] sm:$0xf]
        %v442 = vld [vmem:[%s359 + $0x44] sm:$0xf]
        %v443 = vld [vmem:[%s359 + $0x48] sm:$0xf]
        %v444 = vld [vmem:[%s359 + $0x4c] sm:$0xf]
        %v445 = vld [vmem:[%s359 + $0x50] sm:$0xf]
        %v446 = vld [vmem:[%s359 + $0x54] sm:$0xf]
        %v447 = vld [vmem:[%s359 + $0x58] sm:$0xf]
        %v448 = vld [vmem:[%s359 + $0x5c] sm:$0xf]
        %v449 = vld [vmem:[%s359 + $0x60] sm:$0xf]
        %v450 = vld [vmem:[%s359 + $0x64] sm:$0xf]
        %v451 = vld [vmem:[%s359 + $0x68] sm:$0xf]
        %v452 = vld [vmem:[%s359 + $0x6c] sm:$0xf]
        %v453 = vld [vmem:[%s359 + $0x70] sm:$0xf]
        %v454 = vld [vmem:[%s359 + $0x74] sm:$0xf]
        %v455 = vld [vmem:[%s359 + $0x78] sm:$0xf]
        %v456 = vld [vmem:[%s359 + $0x7c] sm:$0xf]
        %v457 = vld [vmem:[#allocation5] sm:$0xf]
        %v458 = vld [vmem:[#allocation5 + $0x4] sm:$0xf]
        %v459 = vld [vmem:[#allocation5 + $0x8] sm:$0xf]
        %v460 = vld [vmem:[#allocation5 + $0xc] sm:$0xf]
        %v461 = vld [vmem:[#allocation5 + $0x10] sm:$0xf]
        %v462 = vld [vmem:[#allocation5 + $0x14] sm:$0xf]
        %v463 = vld [vmem:[#allocation5 + $0x18] sm:$0xf]
        %v464 = vld [vmem:[#allocation5 + $0x1c] sm:$0xf]
        %v465 = vld [vmem:[#allocation5 + $0x20] sm:$0xf]
        %v466 = vld [vmem:[#allocation5 + $0x24] sm:$0xf]
        %v467 = vld [vmem:[#allocation5 + $0x28] sm:$0xf]
        %v468 = vld [vmem:[#allocation5 + $0x2c] sm:$0xf]
        %v469 = vld [vmem:[#allocation5 + $0x30] sm:$0xf]
        %v470 = vld [vmem:[#allocation5 + $0x34] sm:$0xf]
        %v471 = vld [vmem:[#allocation5 + $0x38] sm:$0xf]
        %v472 = vld [vmem:[#allocation5 + $0x3c] sm:$0xf]
        %v473 = vld [vmem:[#allocation13] ss:$0 sm:$0xff]
        %v506 = vunpack.c.l.b16 %v425
        %v507 = vunpack.c.l.b16 %v426
        %v508 = vunpack.c.l.b16 %v427
        %v509 = vunpack.c.l.b16 %v428
        %v510 = vunpack.c.l.b16 %v429
        %v511 = vunpack.c.l.b16 %v430
        %v512 = vunpack.c.l.b16 %v431
        %v513 = vunpack.c.l.b16 %v432
        %v514 = vunpack.c.l.b16 %v433
        %v515 = vunpack.c.l.b16 %v434
        %v516 = vunpack.c.l.b16 %v435
        %v517 = vunpack.c.l.b16 %v436
        %v518 = vunpack.c.l.b16 %v437
        %v519 = vunpack.c.l.b16 %v438
        %v520 = vunpack.c.l.b16 %v439
        %v521 = vunpack.c.l.b16 %v440
        %v522 = vunpack.c.l.b16 %v441
        %v523 = vunpack.c.l.b16 %v442
        %v524 = vunpack.c.l.b16 %v443
        %v525 = vunpack.c.l.b16 %v444
        %v526 = vunpack.c.l.b16 %v445
        %v527 = vunpack.c.l.b16 %v446
        %v528 = vunpack.c.l.b16 %v447
        %v529 = vunpack.c.l.b16 %v448
        %v530 = vunpack.c.l.b16 %v449
        %v531 = vunpack.c.l.b16 %v450
        %v532 = vunpack.c.l.b16 %v451
        %v533 = vunpack.c.l.b16 %v452
        %v534 = vunpack.c.l.b16 %v453
        %v535 = vunpack.c.l.b16 %v454
        %v536 = vunpack.c.l.b16 %v455
        %v537 = vunpack.c.l.b16 %v456
        %v538 = vpack.c.b16 %v507, %v506
        %v539 = vpack.c.b16 %v509, %v508
        %v540 = vpack.c.b16 %v511, %v510
        %v541 = vpack.c.b16 %v513, %v512
        %v542 = vpack.c.b16 %v515, %v514
        %v543 = vpack.c.b16 %v517, %v516
        %v544 = vpack.c.b16 %v519, %v518
        %v545 = vpack.c.b16 %v521, %v520
        %v546 = vpack.c.b16 %v523, %v522
        %v547 = vpack.c.b16 %v525, %v524
        %v548 = vpack.c.b16 %v527, %v526
        %v549 = vpack.c.b16 %v529, %v528
        %v550 = vpack.c.b16 %v531, %v530
        %v551 = vpack.c.b16 %v533, %v532
        %v552 = vpack.c.b16 %v535, %v534
        %v553 = vpack.c.b16 %v537, %v536
        %v586 = vunpack.c.l.b16 %v457
        %v587 = vunpack.c.l.b16 %v458
        %v588 = vunpack.c.l.b16 %v459
        %v589 = vunpack.c.l.b16 %v460
        %v590 = vunpack.c.l.b16 %v461
        %v591 = vunpack.c.l.b16 %v462
        %v592 = vunpack.c.l.b16 %v463
        %v593 = vunpack.c.l.b16 %v464
        %v594 = vunpack.c.l.b16 %v465
        %v595 = vunpack.c.l.b16 %v466
        %v596 = vunpack.c.l.b16 %v467
        %v597 = vunpack.c.l.b16 %v468
        %v598 = vunpack.c.l.b16 %v469
        %v599 = vunpack.c.l.b16 %v470
        %v600 = vunpack.c.l.b16 %v471
        %v601 = vunpack.c.l.b16 %v472
        %v602 = vpack.c.b16 %v587, %v586
        %v603 = vpack.c.b16 %v589, %v588
        %v604 = vpack.c.b16 %v591, %v590
        %v605 = vpack.c.b16 %v593, %v592
        %v606 = vpack.c.b16 %v595, %v594
        %v607 = vpack.c.b16 %v597, %v596
        %v608 = vpack.c.b16 %v599, %v598
        %v609 = vpack.c.b16 %v601, %v600
        %618 = vmatpush.bf16.msra.mxu0 %v609
        %619 = vmatpush.bf16.msra.mxu0 %v608
        %620 = vmatpush.bf16.msra.mxu0 %v607
        %621 = vmatpush.bf16.msra.mxu0 %v606
        %622 = vmatpush.bf16.msra.mxu0 %v605
        %623 = vmatpush.bf16.msra.mxu0 %v604
        %624 = vmatpush.bf16.msra.mxu0 %v603
        %625 = vmatpush.bf16.msra.mxu0 %v602
        %626 = vmatmul.bf16.gmra.mxu0 %v538
        %v627 = vpop.f32.mrf.mxu0
        %v628 = vadd.f32 %v473, %v627
        %v629 = vpop.f32.mrf.mxu0
        %v630 = vadd.f32 %v473, %v629
        %631 = vmatmul.bf16.gmra.mxu0 %v539
        %v632 = vpop.f32.mrf.mxu0
        %v633 = vadd.f32 %v473, %v632
        %v634 = vpop.f32.mrf.mxu0
        %v635 = vadd.f32 %v473, %v634
        %636 = vmatmul.bf16.gmra.mxu0 %v540
        %v637 = vpop.f32.mrf.mxu0
        %v638 = vadd.f32 %v473, %v637
        %v639 = vpop.f32.mrf.mxu0
        %v640 = vadd.f32 %v473, %v639
        %641 = vmatmul.bf16.gmra.mxu0 %v541
        %v642 = vpop.f32.mrf.mxu0
        %v643 = vadd.f32 %v473, %v642
        %v644 = vpop.f32.mrf.mxu0
        %v645 = vadd.f32 %v473, %v644
        %646 = vmatmul.bf16.gmra.mxu0 %v542
        %v647 = vpop.f32.mrf.mxu0
        %v648 = vadd.f32 %v473, %v647
        %v649 = vpop.f32.mrf.mxu0
        %v650 = vadd.f32 %v473, %v649
        %651 = vmatmul.bf16.gmra.mxu0 %v543
        %v652 = vpop.f32.mrf.mxu0
        %v653 = vadd.f32 %v473, %v652
        %v654 = vpop.f32.mrf.mxu0
        %v655 = vadd.f32 %v473, %v654
        %656 = vmatmul.bf16.gmra.mxu0 %v544
        %v657 = vpop.f32.mrf.mxu0
        %v658 = vadd.f32 %v473, %v657
        %v659 = vpop.f32.mrf.mxu0
        %v660 = vadd.f32 %v473, %v659
        %661 = vmatmul.bf16.gmra.mxu0 %v545
        %v662 = vpop.f32.mrf.mxu0
        %v663 = vadd.f32 %v473, %v662
        %v664 = vpop.f32.mrf.mxu0
        %v665 = vadd.f32 %v473, %v664
        %666 = vmatmul.bf16.gmra.mxu0 %v546
        %v667 = vpop.f32.mrf.mxu0
        %v668 = vadd.f32 %v473, %v667
        %v669 = vpop.f32.mrf.mxu0
        %v670 = vadd.f32 %v473, %v669
        %671 = vmatmul.bf16.gmra.mxu0 %v547
        %v672 = vpop.f32.mrf.mxu0
        %v673 = vadd.f32 %v473, %v672
        %v674 = vpop.f32.mrf.mxu0
        %v675 = vadd.f32 %v473, %v674
        %676 = vmatmul.bf16.gmra.mxu0 %v548
        %v677 = vpop.f32.mrf.mxu0
        %v678 = vadd.f32 %v473, %v677
        %v679 = vpop.f32.mrf.mxu0
        %v680 = vadd.f32 %v473, %v679
        %681 = vmatmul.bf16.gmra.mxu0 %v549
        %v682 = vpop.f32.mrf.mxu0
        %v683 = vadd.f32 %v473, %v682
        %v684 = vpop.f32.mrf.mxu0
        %v685 = vadd.f32 %v473, %v684
        %686 = vmatmul.bf16.gmra.mxu0 %v550
        %v687 = vpop.f32.mrf.mxu0
        %v688 = vadd.f32 %v473, %v687
        %v689 = vpop.f32.mrf.mxu0
        %v690 = vadd.f32 %v473, %v689
        %691 = vmatmul.bf16.gmra.mxu0 %v551
        %v692 = vpop.f32.mrf.mxu0
        %v693 = vadd.f32 %v473, %v692
        %v694 = vpop.f32.mrf.mxu0
        %v695 = vadd.f32 %v473, %v694
        %696 = vmatmul.bf16.gmra.mxu0 %v552
        %v697 = vpop.f32.mrf.mxu0
        %v698 = vadd.f32 %v473, %v697
        %v699 = vpop.f32.mrf.mxu0
        %v700 = vadd.f32 %v473, %v699
        %701 = vmatmul.bf16.gmra.mxu0 %v553
        %v702 = vpop.f32.mrf.mxu0
        %v703 = vadd.f32 %v473, %v702
        %v704 = vpop.f32.mrf.mxu0
        %v705 = vadd.f32 %v473, %v704
        %706 = vdwg.mxu0
        %v707 = vmax.f32 %v628, 0.0
        %v708 = vmax.f32 %v630, 0.0
        %v709 = vmax.f32 %v633, 0.0
        %v710 = vmax.f32 %v635, 0.0
        %v711 = vmax.f32 %v638, 0.0
        %v712 = vmax.f32 %v640, 0.0
        %v713 = vmax.f32 %v643, 0.0
        %v714 = vmax.f32 %v645, 0.0
        %v715 = vmax.f32 %v648, 0.0
        %v716 = vmax.f32 %v650, 0.0
        %v717 = vmax.f32 %v653, 0.0
        %v718 = vmax.f32 %v655, 0.0
        %v719 = vmax.f32 %v658, 0.0
        %v720 = vmax.f32 %v660, 0.0
        %v721 = vmax.f32 %v663, 0.0
        %v722 = vmax.f32 %v665, 0.0
        %v723 = vmax.f32 %v668, 0.0
        %v724 = vmax.f32 %v670, 0.0
        %v725 = vmax.f32 %v673, 0.0
        %v726 = vmax.f32 %v675, 0.0
        %v727 = vmax.f32 %v678, 0.0
        %v728 = vmax.f32 %v680, 0.0
        %v729 = vmax.f32 %v683, 0.0
        %v730 = vmax.f32 %v685, 0.0
        %v731 = vmax.f32 %v688, 0.0
        %v732 = vmax.f32 %v690, 0.0
        %v733 = vmax.f32 %v693, 0.0
        %v734 = vmax.f32 %v695, 0.0
        %v735 = vmax.f32 %v698, 0.0
        %v736 = vmax.f32 %v700, 0.0
        %v737 = vmax.f32 %v703, 0.0
        %v738 = vmax.f32 %v705, 0.0
        %v739 = vld [vmem:[#allocation7] sm:$0xf]
        %v740 = vld [vmem:[#allocation7 + $0x4] sm:$0xf]
        %v741 = vld [vmem:[#allocation7 + $0x8] sm:$0xf]
        %v742 = vld [vmem:[#allocation7 + $0xc] sm:$0xf]
        %v743 = vld [vmem:[#allocation7 + $0x10] sm:$0xf]
        %v744 = vld [vmem:[#allocation7 + $0x14] sm:$0xf]
        %v745 = vld [vmem:[#allocation7 + $0x18] sm:$0xf]
        %v746 = vld [vmem:[#allocation7 + $0x1c] sm:$0xf]
        %v747 = vld [vmem:[#allocation7 + $0x20] sm:$0xf]
        %v748 = vld [vmem:[#allocation7 + $0x24] sm:$0xf]
        %v749 = vld [vmem:[#allocation7 + $0x28] sm:$0xf]
        %v750 = vld [vmem:[#allocation7 + $0x2c] sm:$0xf]
        %v751 = vld [vmem:[#allocation7 + $0x30] sm:$0xf]
        %v752 = vld [vmem:[#allocation7 + $0x34] sm:$0xf]
        %v753 = vld [vmem:[#allocation7 + $0x38] sm:$0xf]
        %v754 = vld [vmem:[#allocation7 + $0x3c] sm:$0xf]
        %v771 = vunpack.c.l.b16 %v739
        %v772 = vunpack.c.l.b16 %v740
        %v773 = vunpack.c.l.b16 %v741
        %v774 = vunpack.c.l.b16 %v742
        %v775 = vunpack.c.l.b16 %v743
        %v776 = vunpack.c.l.b16 %v744
        %v777 = vunpack.c.l.b16 %v745
        %v778 = vunpack.c.l.b16 %v746
        %v779 = vunpack.c.l.b16 %v747
        %v780 = vunpack.c.l.b16 %v748
        %v781 = vunpack.c.l.b16 %v749
        %v782 = vunpack.c.l.b16 %v750
        %v783 = vunpack.c.l.b16 %v751
        %v784 = vunpack.c.l.b16 %v752
        %v785 = vunpack.c.l.b16 %v753
        %v786 = vunpack.c.l.b16 %v754
        %v787 = vpack.c.b16 %v772, %v771
        %v788 = vpack.c.b16 %v774, %v773
        %v789 = vpack.c.b16 %v776, %v775
        %v790 = vpack.c.b16 %v778, %v777
        %v791 = vpack.c.b16 %v780, %v779
        %v792 = vpack.c.b16 %v782, %v781
        %v793 = vpack.c.b16 %v784, %v783
        %v794 = vpack.c.b16 %v786, %v785
        %803 = vmatpush.bf16.msra.mxu0 %v794
        %804 = vmatpush.bf16.msra.mxu0 %v793
        %805 = vmatpush.bf16.msra.mxu0 %v792
        %806 = vmatpush.bf16.msra.mxu0 %v791
        %807 = vmatpush.bf16.msra.mxu0 %v790
        %808 = vmatpush.bf16.msra.mxu0 %v789
        %809 = vmatpush.bf16.msra.mxu0 %v788
        %810 = vmatpush.bf16.msra.mxu0 %v787
        %811 = vmatmul.bf16.gmra.mxu0 %v538
        %v812 = vpop.f32.mrf.mxu0
        %v813 = vadd.f32 0.0, %v812
        %v814 = vpop.f32.mrf.mxu0
        %v815 = vadd.f32 0.0, %v814
        %816 = vmatmul.bf16.gmra.mxu0 %v539
        %v817 = vpop.f32.mrf.mxu0
        %v818 = vadd.f32 0.0, %v817
        %v819 = vpop.f32.mrf.mxu0
        %v820 = vadd.f32 0.0, %v819
        %821 = vmatmul.bf16.gmra.mxu0 %v540
        %v822 = vpop.f32.mrf.mxu0
        %v823 = vadd.f32 0.0, %v822
        %v824 = vpop.f32.mrf.mxu0
        %v825 = vadd.f32 0.0, %v824
        %826 = vmatmul.bf16.gmra.mxu0 %v541
        %v827 = vpop.f32.mrf.mxu0
        %v828 = vadd.f32 0.0, %v827
        %v829 = vpop.f32.mrf.mxu0
        %v830 = vadd.f32 0.0, %v829
        %831 = vmatmul.bf16.gmra.mxu0 %v542
        %v832 = vpop.f32.mrf.mxu0
        %v833 = vadd.f32 0.0, %v832
        %v834 = vpop.f32.mrf.mxu0
        %v835 = vadd.f32 0.0, %v834
        %836 = vmatmul.bf16.gmra.mxu0 %v543
        %v837 = vpop.f32.mrf.mxu0
        %v838 = vadd.f32 0.0, %v837
        %v839 = vpop.f32.mrf.mxu0
        %v840 = vadd.f32 0.0, %v839
        %841 = vmatmul.bf16.gmra.mxu0 %v544
        %v842 = vpop.f32.mrf.mxu0
        %v843 = vadd.f32 0.0, %v842
        %v844 = vpop.f32.mrf.mxu0
        %v845 = vadd.f32 0.0, %v844
        %846 = vmatmul.bf16.gmra.mxu0 %v545
        %v847 = vpop.f32.mrf.mxu0
        %v848 = vadd.f32 0.0, %v847
        %v849 = vpop.f32.mrf.mxu0
        %v850 = vadd.f32 0.0, %v849
        %851 = vmatmul.bf16.gmra.mxu0 %v546
        %v852 = vpop.f32.mrf.mxu0
        %v853 = vadd.f32 0.0, %v852
        %v854 = vpop.f32.mrf.mxu0
        %v855 = vadd.f32 0.0, %v854
        %856 = vmatmul.bf16.gmra.mxu0 %v547
        %v857 = vpop.f32.mrf.mxu0
        %v858 = vadd.f32 0.0, %v857
        %v859 = vpop.f32.mrf.mxu0
        %v860 = vadd.f32 0.0, %v859
        %861 = vmatmul.bf16.gmra.mxu0 %v548
        %v862 = vpop.f32.mrf.mxu0
        %v863 = vadd.f32 0.0, %v862
        %v864 = vpop.f32.mrf.mxu0
        %v865 = vadd.f32 0.0, %v864
        %866 = vmatmul.bf16.gmra.mxu0 %v549
        %v867 = vpop.f32.mrf.mxu0
        %v868 = vadd.f32 0.0, %v867
        %v869 = vpop.f32.mrf.mxu0
        %v870 = vadd.f32 0.0, %v869
        %871 = vmatmul.bf16.gmra.mxu0 %v550
        %v872 = vpop.f32.mrf.mxu0
        %v873 = vadd.f32 0.0, %v872
        %v874 = vpop.f32.mrf.mxu0
        %v875 = vadd.f32 0.0, %v874
        %876 = vmatmul.bf16.gmra.mxu0 %v551
        %v877 = vpop.f32.mrf.mxu0
        %v878 = vadd.f32 0.0, %v877
        %v879 = vpop.f32.mrf.mxu0
        %v880 = vadd.f32 0.0, %v879
        %881 = vmatmul.bf16.gmra.mxu0 %v552
        %v882 = vpop.f32.mrf.mxu0
        %v883 = vadd.f32 0.0, %v882
        %v884 = vpop.f32.mrf.mxu0
        %v885 = vadd.f32 0.0, %v884
        %886 = vmatmul.bf16.gmra.mxu0 %v553
        %v887 = vpop.f32.mrf.mxu0
        %v888 = vadd.f32 0.0, %v887
        %v889 = vpop.f32.mrf.mxu0
        %v890 = vadd.f32 0.0, %v889
        %891 = vdwg.mxu0
        %v892 = vadd.f32 %v707, %v813
        %v893 = vadd.f32 %v708, %v815
        %v894 = vadd.f32 %v709, %v818
        %v895 = vadd.f32 %v710, %v820
        %v896 = vadd.f32 %v711, %v823
        %v897 = vadd.f32 %v712, %v825
        %v898 = vadd.f32 %v713, %v828
        %v899 = vadd.f32 %v714, %v830
        %v900 = vadd.f32 %v715, %v833
        %v901 = vadd.f32 %v716, %v835
        %v902 = vadd.f32 %v717, %v838
        %v903 = vadd.f32 %v718, %v840
        %v904 = vadd.f32 %v719, %v843
        %v905 = vadd.f32 %v720, %v845
        %v906 = vadd.f32 %v721, %v848
        %v907 = vadd.f32 %v722, %v850
        %v908 = vadd.f32 %v723, %v853
        %v909 = vadd.f32 %v724, %v855
        %v910 = vadd.f32 %v725, %v858
        %v911 = vadd.f32 %v726, %v860
        %v912 = vadd.f32 %v727, %v863
        %v913 = vadd.f32 %v728, %v865
        %v914 = vadd.f32 %v729, %v868
        %v915 = vadd.f32 %v730, %v870
        %v916 = vadd.f32 %v731, %v873
        %v917 = vadd.f32 %v732, %v875
        %v918 = vadd.f32 %v733, %v878
        %v919 = vadd.f32 %v734, %v880
        %v920 = vadd.f32 %v735, %v883
        %v921 = vadd.f32 %v736, %v885
        %v922 = vadd.f32 %v737, %v888
        %v923 = vadd.f32 %v738, %v890
        %v924 = vld [vmem:[#allocation13 + $0x1] ss:$0 sm:$0xff]
        %v925 = vadd.f32 %v892, %v924
        %v926 = vadd.f32 %v893, %v924
        %v927 = vadd.f32 %v894, %v924
        %v928 = vadd.f32 %v895, %v924
        %v929 = vadd.f32 %v896, %v924
        %v930 = vadd.f32 %v897, %v924
        %v931 = vadd.f32 %v898, %v924
        %v932 = vadd.f32 %v899, %v924
        %v933 = vadd.f32 %v900, %v924
        %v934 = vadd.f32 %v901, %v924
        %v935 = vadd.f32 %v902, %v924
        %v936 = vadd.f32 %v903, %v924
        %v937 = vadd.f32 %v904, %v924
        %v938 = vadd.f32 %v905, %v924
        %v939 = vadd.f32 %v906, %v924
        %v940 = vadd.f32 %v907, %v924
        %v941 = vadd.f32 %v908, %v924
        %v942 = vadd.f32 %v909, %v924
        %v943 = vadd.f32 %v910, %v924
        %v944 = vadd.f32 %v911, %v924
        %v945 = vadd.f32 %v912, %v924
        %v946 = vadd.f32 %v913, %v924
        %v947 = vadd.f32 %v914, %v924
        %v948 = vadd.f32 %v915, %v924
        %v949 = vadd.f32 %v916, %v924
        %v950 = vadd.f32 %v917, %v924
        %v951 = vadd.f32 %v918, %v924
        %v952 = vadd.f32 %v919, %v924
        %v953 = vadd.f32 %v920, %v924
        %v954 = vadd.f32 %v921, %v924
        %v955 = vadd.f32 %v922, %v924
        %v956 = vadd.f32 %v923, %v924
        %v957 = vpack.c.bf16 %v926, %v925
        %v958 = vpack.c.bf16 %v928, %v927
        %v959 = vpack.c.bf16 %v930, %v929
        %v960 = vpack.c.bf16 %v932, %v931
        %v961 = vpack.c.bf16 %v934, %v933
        %v962 = vpack.c.bf16 %v936, %v935
        %v963 = vpack.c.bf16 %v938, %v937
        %v964 = vpack.c.bf16 %v940, %v939
        %v965 = vpack.c.bf16 %v942, %v941
        %v966 = vpack.c.bf16 %v944, %v943
        %v967 = vpack.c.bf16 %v946, %v945
        %v968 = vpack.c.bf16 %v948, %v947
        %v969 = vpack.c.bf16 %v950, %v949
        %v970 = vpack.c.bf16 %v952, %v951
        %v971 = vpack.c.bf16 %v954, %v953
        %v972 = vpack.c.bf16 %v956, %v955
        %v973 = vld [vmem:[#allocation8] sm:$0xff]
        %v974 = vld [vmem:[#allocation8 + $0x8] sm:$0xff]
        %v975 = vld [vmem:[#allocation8 + $0x10] sm:$0xff]
        %v976 = vld [vmem:[#allocation8 + $0x18] sm:$0xff]
        %v977 = vld [vmem:[#allocation8 + $0x20] sm:$0xff]
        %v978 = vld [vmem:[#allocation8 + $0x28] sm:$0xff]
        %v979 = vld [vmem:[#allocation8 + $0x30] sm:$0xff]
        %v980 = vld [vmem:[#allocation8 + $0x38] sm:$0xff]
        %v981 = vld [vmem:[#allocation8 + $0x40] sm:$0xff]
        %v982 = vld [vmem:[#allocation8 + $0x48] sm:$0xff]
        %v983 = vld [vmem:[#allocation8 + $0x50] sm:$0xff]
        %v984 = vld [vmem:[#allocation8 + $0x58] sm:$0xff]
        %v985 = vld [vmem:[#allocation8 + $0x60] sm:$0xff]
        %v986 = vld [vmem:[#allocation8 + $0x68] sm:$0xff]
        %v987 = vld [vmem:[#allocation8 + $0x70] sm:$0xff]
        %v988 = vld [vmem:[#allocation8 + $0x78] sm:$0xff]
        %s989 = scalar_lea.vmem [#allocation13], 2
        %v990 = vld [vmem:[%s989] ss:$8 sm:$0x3]
        %v992 = vperm.slane %v990, 0
        %v993 = vperm.slane %v990, 1
        %v1012 = vunpack.c.l.b16 %v973
        %v1013 = vunpack.c.h.b16 %v973
        %v1014 = vunpack.c.l.b16 %v974
        %v1015 = vunpack.c.h.b16 %v974
        %v1016 = vunpack.c.l.b16 %v975
        %v1017 = vunpack.c.h.b16 %v975
        %v1018 = vunpack.c.l.b16 %v976
        %v1019 = vunpack.c.h.b16 %v976
        %v1020 = vunpack.c.l.b16 %v977
        %v1021 = vunpack.c.h.b16 %v977
        %v1022 = vunpack.c.l.b16 %v978
        %v1023 = vunpack.c.h.b16 %v978
        %v1024 = vunpack.c.l.b16 %v979
        %v1025 = vunpack.c.h.b16 %v979
        %v1026 = vunpack.c.l.b16 %v980
        %v1027 = vunpack.c.h.b16 %v980
        %v1028 = vunpack.c.l.b16 %v981
        %v1029 = vunpack.c.h.b16 %v981
        %v1030 = vunpack.c.l.b16 %v982
        %v1031 = vunpack.c.h.b16 %v982
        %v1032 = vunpack.c.l.b16 %v983
        %v1033 = vunpack.c.h.b16 %v983
        %v1034 = vunpack.c.l.b16 %v984
        %v1035 = vunpack.c.h.b16 %v984
        %v1036 = vunpack.c.l.b16 %v985
        %v1037 = vunpack.c.h.b16 %v985
        %v1038 = vunpack.c.l.b16 %v986
        %v1039 = vunpack.c.h.b16 %v986
        %v1040 = vunpack.c.l.b16 %v987
        %v1041 = vunpack.c.h.b16 %v987
        %v1042 = vunpack.c.l.b16 %v988
        %v1043 = vunpack.c.h.b16 %v988
        %v1044 = vpack.c.b16 %v1014, %v1012
        %v1045 = vpack.c.b16 %v1015, %v1013
        %v1046 = vpack.c.b16 %v1018, %v1016
        %v1047 = vpack.c.b16 %v1019, %v1017
        %v1048 = vpack.c.b16 %v1022, %v1020
        %v1049 = vpack.c.b16 %v1023, %v1021
        %v1050 = vpack.c.b16 %v1026, %v1024
        %v1051 = vpack.c.b16 %v1027, %v1025
        %v1052 = vpack.c.b16 %v1030, %v1028
        %v1053 = vpack.c.b16 %v1031, %v1029
        %v1054 = vpack.c.b16 %v1034, %v1032
        %v1055 = vpack.c.b16 %v1035, %v1033
        %v1056 = vpack.c.b16 %v1038, %v1036
        %v1057 = vpack.c.b16 %v1039, %v1037
        %v1058 = vpack.c.b16 %v1042, %v1040
        %v1059 = vpack.c.b16 %v1043, %v1041
        %1076 = vmatpush.bf16.msra.mxu0 %v1058
        %1077 = vmatpush.bf16.msra.mxu0 %v1056
        %1078 = vmatpush.bf16.msra.mxu0 %v1054
        %1079 = vmatpush.bf16.msra.mxu0 %v1052
        %1080 = vmatpush.bf16.msra.mxu0 %v1050
        %1081 = vmatpush.bf16.msra.mxu0 %v1048
        %1082 = vmatpush.bf16.msra.mxu0 %v1046
        %1083 = vmatpush.bf16.msra.mxu0 %v1044
        %1084 = vmatmul.bf16.gmra.mxu0 %v957
        %v1085 = vpop.f32.mrf.mxu0
        %v1086 = vadd.f32 %v992, %v1085
        %v1087 = vpop.f32.mrf.mxu0
        %v1088 = vadd.f32 %v992, %v1087
        %1089 = vmatmul.bf16.gmra.mxu0 %v958
        %v1090 = vpop.f32.mrf.mxu0
        %v1091 = vadd.f32 %v992, %v1090
        %v1092 = vpop.f32.mrf.mxu0
        %v1093 = vadd.f32 %v992, %v1092
        %1094 = vmatmul.bf16.gmra.mxu0 %v959
        %v1095 = vpop.f32.mrf.mxu0
        %v1096 = vadd.f32 %v992, %v1095
        %v1097 = vpop.f32.mrf.mxu0
        %v1098 = vadd.f32 %v992, %v1097
        %1099 = vmatmul.bf16.gmra.mxu0 %v960
        %v1100 = vpop.f32.mrf.mxu0
        %v1101 = vadd.f32 %v992, %v1100
        %v1102 = vpop.f32.mrf.mxu0
        %v1103 = vadd.f32 %v992, %v1102
        %1104 = vmatmul.bf16.gmra.mxu0 %v961
        %v1105 = vpop.f32.mrf.mxu0
        %v1106 = vadd.f32 %v992, %v1105
        %v1107 = vpop.f32.mrf.mxu0
        %v1108 = vadd.f32 %v992, %v1107
        %1109 = vmatmul.bf16.gmra.mxu0 %v962
        %v1110 = vpop.f32.mrf.mxu0
        %v1111 = vadd.f32 %v992, %v1110
        %v1112 = vpop.f32.mrf.mxu0
        %v1113 = vadd.f32 %v992, %v1112
        %1114 = vmatmul.bf16.gmra.mxu0 %v963
        %v1115 = vpop.f32.mrf.mxu0
        %v1116 = vadd.f32 %v992, %v1115
        %v1117 = vpop.f32.mrf.mxu0
        %v1118 = vadd.f32 %v992, %v1117
        %1119 = vmatmul.bf16.gmra.mxu0 %v964
        %v1120 = vpop.f32.mrf.mxu0
        %v1121 = vadd.f32 %v992, %v1120
        %v1122 = vpop.f32.mrf.mxu0
        %v1123 = vadd.f32 %v992, %v1122
        %1124 = vmatmul.bf16.gmra.mxu0 %v965
        %v1125 = vpop.f32.mrf.mxu0
        %v1126 = vadd.f32 %v992, %v1125
        %v1127 = vpop.f32.mrf.mxu0
        %v1128 = vadd.f32 %v992, %v1127
        %1129 = vmatmul.bf16.gmra.mxu0 %v966
        %v1130 = vpop.f32.mrf.mxu0
        %v1131 = vadd.f32 %v992, %v1130
        %v1132 = vpop.f32.mrf.mxu0
        %v1133 = vadd.f32 %v992, %v1132
        %1134 = vmatmul.bf16.gmra.mxu0 %v967
        %v1135 = vpop.f32.mrf.mxu0
        %v1136 = vadd.f32 %v992, %v1135
        %v1137 = vpop.f32.mrf.mxu0
        %v1138 = vadd.f32 %v992, %v1137
        %1139 = vmatmul.bf16.gmra.mxu0 %v968
        %v1140 = vpop.f32.mrf.mxu0
        %v1141 = vadd.f32 %v992, %v1140
        %v1142 = vpop.f32.mrf.mxu0
        %v1143 = vadd.f32 %v992, %v1142
        %1144 = vmatmul.bf16.gmra.mxu0 %v969
        %v1145 = vpop.f32.mrf.mxu0
        %v1146 = vadd.f32 %v992, %v1145
        %v1147 = vpop.f32.mrf.mxu0
        %v1148 = vadd.f32 %v992, %v1147
        %1149 = vmatmul.bf16.gmra.mxu0 %v970
        %v1150 = vpop.f32.mrf.mxu0
        %v1151 = vadd.f32 %v992, %v1150
        %v1152 = vpop.f32.mrf.mxu0
        %v1153 = vadd.f32 %v992, %v1152
        %1154 = vmatmul.bf16.gmra.mxu0 %v971
        %v1155 = vpop.f32.mrf.mxu0
        %v1156 = vadd.f32 %v992, %v1155
        %v1157 = vpop.f32.mrf.mxu0
        %v1158 = vadd.f32 %v992, %v1157
        %1159 = vmatmul.bf16.gmra.mxu0 %v972
        %v1160 = vpop.f32.mrf.mxu0
        %v1161 = vadd.f32 %v992, %v1160
        %v1162 = vpop.f32.mrf.mxu0
        %v1163 = vadd.f32 %v992, %v1162
        %1164 = vdwg.mxu0
        %1165 = vmatpush.bf16.msra.mxu0 %v1059
        %1166 = vmatpush.bf16.msra.mxu0 %v1057
        %1167 = vmatpush.bf16.msra.mxu0 %v1055
        %1168 = vmatpush.bf16.msra.mxu0 %v1053
        %1169 = vmatpush.bf16.msra.mxu0 %v1051
        %1170 = vmatpush.bf16.msra.mxu0 %v1049
        %1171 = vmatpush.bf16.msra.mxu0 %v1047
        %1172 = vmatpush.bf16.msra.mxu0 %v1045
        %1173 = vmatmul.bf16.gmra.mxu0 %v957
        %v1174 = vpop.f32.mrf.mxu0
        %v1175 = vadd.f32 %v993, %v1174
        %v1176 = vpop.f32.mrf.mxu0
        %v1177 = vadd.f32 %v993, %v1176
        %1178 = vmatmul.bf16.gmra.mxu0 %v958
        %v1179 = vpop.f32.mrf.mxu0
        %v1180 = vadd.f32 %v993, %v1179
        %v1181 = vpop.f32.mrf.mxu0
        %v1182 = vadd.f32 %v993, %v1181
        %1183 = vmatmul.bf16.gmra.mxu0 %v959
        %v1184 = vpop.f32.mrf.mxu0
        %v1185 = vadd.f32 %v993, %v1184
        %v1186 = vpop.f32.mrf.mxu0
        %v1187 = vadd.f32 %v993, %v1186
        %1188 = vmatmul.bf16.gmra.mxu0 %v960
        %v1189 = vpop.f32.mrf.mxu0
        %v1190 = vadd.f32 %v993, %v1189
        %v1191 = vpop.f32.mrf.mxu0
        %v1192 = vadd.f32 %v993, %v1191
        %1193 = vmatmul.bf16.gmra.mxu0 %v961
        %v1194 = vpop.f32.mrf.mxu0
        %v1195 = vadd.f32 %v993, %v1194
        %v1196 = vpop.f32.mrf.mxu0
        %v1197 = vadd.f32 %v993, %v1196
        %1198 = vmatmul.bf16.gmra.mxu0 %v962
        %v1199 = vpop.f32.mrf.mxu0
        %v1200 = vadd.f32 %v993, %v1199
        %v1201 = vpop.f32.mrf.mxu0
        %v1202 = vadd.f32 %v993, %v1201
        %1203 = vmatmul.bf16.gmra.mxu0 %v963
        %v1204 = vpop.f32.mrf.mxu0
        %v1205 = vadd.f32 %v993, %v1204
        %v1206 = vpop.f32.mrf.mxu0
        %v1207 = vadd.f32 %v993, %v1206
        %1208 = vmatmul.bf16.gmra.mxu0 %v964
        %v1209 = vpop.f32.mrf.mxu0
        %v1210 = vadd.f32 %v993, %v1209
        %v1211 = vpop.f32.mrf.mxu0
        %v1212 = vadd.f32 %v993, %v1211
        %1213 = vmatmul.bf16.gmra.mxu0 %v965
        %v1214 = vpop.f32.mrf.mxu0
        %v1215 = vadd.f32 %v993, %v1214
        %v1216 = vpop.f32.mrf.mxu0
        %v1217 = vadd.f32 %v993, %v1216
        %1218 = vmatmul.bf16.gmra.mxu0 %v966
        %v1219 = vpop.f32.mrf.mxu0
        %v1220 = vadd.f32 %v993, %v1219
        %v1221 = vpop.f32.mrf.mxu0
        %v1222 = vadd.f32 %v993, %v1221
        %1223 = vmatmul.bf16.gmra.mxu0 %v967
        %v1224 = vpop.f32.mrf.mxu0
        %v1225 = vadd.f32 %v993, %v1224
        %v1226 = vpop.f32.mrf.mxu0
        %v1227 = vadd.f32 %v993, %v1226
        %1228 = vmatmul.bf16.gmra.mxu0 %v968
        %v1229 = vpop.f32.mrf.mxu0
        %v1230 = vadd.f32 %v993, %v1229
        %v1231 = vpop.f32.mrf.mxu0
        %v1232 = vadd.f32 %v993, %v1231
        %1233 = vmatmul.bf16.gmra.mxu0 %v969
        %v1234 = vpop.f32.mrf.mxu0
        %v1235 = vadd.f32 %v993, %v1234
        %v1236 = vpop.f32.mrf.mxu0
        %v1237 = vadd.f32 %v993, %v1236
        %1238 = vmatmul.bf16.gmra.mxu0 %v970
        %v1239 = vpop.f32.mrf.mxu0
        %v1240 = vadd.f32 %v993, %v1239
        %v1241 = vpop.f32.mrf.mxu0
        %v1242 = vadd.f32 %v993, %v1241
        %1243 = vmatmul.bf16.gmra.mxu0 %v971
        %v1244 = vpop.f32.mrf.mxu0
        %v1245 = vadd.f32 %v993, %v1244
        %v1246 = vpop.f32.mrf.mxu0
        %v1247 = vadd.f32 %v993, %v1246
        %1248 = vmatmul.bf16.gmra.mxu0 %v972
        %v1249 = vpop.f32.mrf.mxu0
        %v1250 = vadd.f32 %v993, %v1249
        %v1251 = vpop.f32.mrf.mxu0
        %v1252 = vadd.f32 %v993, %v1251
        %1253 = vdwg.mxu0
        %v1254 = vmax.f32 %v1086, 0.0
        %v1255 = vmax.f32 %v1175, 0.0
        %v1256 = vmax.f32 %v1088, 0.0
        %v1257 = vmax.f32 %v1177, 0.0
        %v1258 = vmax.f32 %v1091, 0.0
        %v1259 = vmax.f32 %v1180, 0.0
        %v1260 = vmax.f32 %v1093, 0.0
        %v1261 = vmax.f32 %v1182, 0.0
        %v1262 = vmax.f32 %v1096, 0.0
        %v1263 = vmax.f32 %v1185, 0.0
        %v1264 = vmax.f32 %v1098, 0.0
        %v1265 = vmax.f32 %v1187, 0.0
        %v1266 = vmax.f32 %v1101, 0.0
        %v1267 = vmax.f32 %v1190, 0.0
        %v1268 = vmax.f32 %v1103, 0.0
        %v1269 = vmax.f32 %v1192, 0.0
        %v1270 = vmax.f32 %v1106, 0.0
        %v1271 = vmax.f32 %v1195, 0.0
        %v1272 = vmax.f32 %v1108, 0.0
        %v1273 = vmax.f32 %v1197, 0.0
        %v1274 = vmax.f32 %v1111, 0.0
        %v1275 = vmax.f32 %v1200, 0.0
        %v1276 = vmax.f32 %v1113, 0.0
        %v1277 = vmax.f32 %v1202, 0.0
        %v1278 = vmax.f32 %v1116, 0.0
        %v1279 = vmax.f32 %v1205, 0.0
        %v1280 = vmax.f32 %v1118, 0.0
        %v1281 = vmax.f32 %v1207, 0.0
        %v1282 = vmax.f32 %v1121, 0.0
        %v1283 = vmax.f32 %v1210, 0.0
        %v1284 = vmax.f32 %v1123, 0.0
        %v1285 = vmax.f32 %v1212, 0.0
        %v1286 = vmax.f32 %v1126, 0.0
        %v1287 = vmax.f32 %v1215, 0.0
        %v1288 = vmax.f32 %v1128, 0.0
        %v1289 = vmax.f32 %v1217, 0.0
        %v1290 = vmax.f32 %v1131, 0.0
        %v1291 = vmax.f32 %v1220, 0.0
        %v1292 = vmax.f32 %v1133, 0.0
        %v1293 = vmax.f32 %v1222, 0.0
        %v1294 = vmax.f32 %v1136, 0.0
        %v1295 = vmax.f32 %v1225, 0.0
        %v1296 = vmax.f32 %v1138, 0.0
        %v1297 = vmax.f32 %v1227, 0.0
        %v1298 = vmax.f32 %v1141, 0.0
        %v1299 = vmax.f32 %v1230, 0.0
        %v1300 = vmax.f32 %v1143, 0.0
        %v1301 = vmax.f32 %v1232, 0.0
        %v1302 = vmax.f32 %v1146, 0.0
        %v1303 = vmax.f32 %v1235, 0.0
        %v1304 = vmax.f32 %v1148, 0.0
        %v1305 = vmax.f32 %v1237, 0.0
        %v1306 = vmax.f32 %v1151, 0.0
        %v1307 = vmax.f32 %v1240, 0.0
        %v1308 = vmax.f32 %v1153, 0.0
        %v1309 = vmax.f32 %v1242, 0.0
        %v1310 = vmax.f32 %v1156, 0.0
        %v1311 = vmax.f32 %v1245, 0.0
        %v1312 = vmax.f32 %v1158, 0.0
        %v1313 = vmax.f32 %v1247, 0.0
        %v1314 = vmax.f32 %v1161, 0.0
        %v1315 = vmax.f32 %v1250, 0.0
        %v1316 = vmax.f32 %v1163, 0.0
        %v1317 = vmax.f32 %v1252, 0.0
        %v1318 = vpack.c.bf16 %v1256, %v1254
        %v1319 = vpack.c.bf16 %v1257, %v1255
        %v1320 = vpack.c.bf16 %v1260, %v1258
        %v1321 = vpack.c.bf16 %v1261, %v1259
        %v1322 = vpack.c.bf16 %v1264, %v1262
        %v1323 = vpack.c.bf16 %v1265, %v1263
        %v1324 = vpack.c.bf16 %v1268, %v1266
        %v1325 = vpack.c.bf16 %v1269, %v1267
        %v1326 = vpack.c.bf16 %v1272, %v1270
        %v1327 = vpack.c.bf16 %v1273, %v1271
        %v1328 = vpack.c.bf16 %v1276, %v1274
        %v1329 = vpack.c.bf16 %v1277, %v1275
        %v1330 = vpack.c.bf16 %v1280, %v1278
        %v1331 = vpack.c.bf16 %v1281, %v1279
        %v1332 = vpack.c.bf16 %v1284, %v1282
        %v1333 = vpack.c.bf16 %v1285, %v1283
        %v1334 = vpack.c.bf16 %v1288, %v1286
        %v1335 = vpack.c.bf16 %v1289, %v1287
        %v1336 = vpack.c.bf16 %v1292, %v1290
        %v1337 = vpack.c.bf16 %v1293, %v1291
        %v1338 = vpack.c.bf16 %v1296, %v1294
        %v1339 = vpack.c.bf16 %v1297, %v1295
        %v1340 = vpack.c.bf16 %v1300, %v1298
        %v1341 = vpack.c.bf16 %v1301, %v1299
        %v1342 = vpack.c.bf16 %v1304, %v1302
        %v1343 = vpack.c.bf16 %v1305, %v1303
        %v1344 = vpack.c.bf16 %v1308, %v1306
        %v1345 = vpack.c.bf16 %v1309, %v1307
        %v1346 = vpack.c.bf16 %v1312, %v1310
        %v1347 = vpack.c.bf16 %v1313, %v1311
        %v1348 = vpack.c.bf16 %v1316, %v1314
        %v1349 = vpack.c.bf16 %v1317, %v1315
        %v1350 = vld [vmem:[#allocation10] sm:$0xf]
        %v1351 = vld [vmem:[#allocation10 + $0x4] sm:$0xf]
        %v1352 = vld [vmem:[#allocation10 + $0x8] sm:$0xf]
        %v1353 = vld [vmem:[#allocation10 + $0xc] sm:$0xf]
        %v1354 = vld [vmem:[#allocation10 + $0x10] sm:$0xf]
        %v1355 = vld [vmem:[#allocation10 + $0x14] sm:$0xf]
        %v1356 = vld [vmem:[#allocation10 + $0x18] sm:$0xf]
        %v1357 = vld [vmem:[#allocation10 + $0x1c] sm:$0xf]
        %v1358 = vld [vmem:[#allocation10 + $0x20] sm:$0xf]
        %v1359 = vld [vmem:[#allocation10 + $0x24] sm:$0xf]
        %v1360 = vld [vmem:[#allocation10 + $0x28] sm:$0xf]
        %v1361 = vld [vmem:[#allocation10 + $0x2c] sm:$0xf]
        %v1362 = vld [vmem:[#allocation10 + $0x30] sm:$0xf]
        %v1363 = vld [vmem:[#allocation10 + $0x34] sm:$0xf]
        %v1364 = vld [vmem:[#allocation10 + $0x38] sm:$0xf]
        %v1365 = vld [vmem:[#allocation10 + $0x3c] sm:$0xf]
        %v1366 = vld [vmem:[#allocation10 + $0x40] sm:$0xf]
        %v1367 = vld [vmem:[#allocation10 + $0x44] sm:$0xf]
        %v1368 = vld [vmem:[#allocation10 + $0x48] sm:$0xf]
        %v1369 = vld [vmem:[#allocation10 + $0x4c] sm:$0xf]
        %v1370 = vld [vmem:[#allocation10 + $0x50] sm:$0xf]
        %v1371 = vld [vmem:[#allocation10 + $0x54] sm:$0xf]
        %v1372 = vld [vmem:[#allocation10 + $0x58] sm:$0xf]
        %v1373 = vld [vmem:[#allocation10 + $0x5c] sm:$0xf]
        %v1374 = vld [vmem:[#allocation10 + $0x60] sm:$0xf]
        %v1375 = vld [vmem:[#allocation10 + $0x64] sm:$0xf]
        %v1376 = vld [vmem:[#allocation10 + $0x68] sm:$0xf]
        %v1377 = vld [vmem:[#allocation10 + $0x6c] sm:$0xf]
        %v1378 = vld [vmem:[#allocation10 + $0x70] sm:$0xf]
        %v1379 = vld [vmem:[#allocation10 + $0x74] sm:$0xf]
        %v1380 = vld [vmem:[#allocation10 + $0x78] sm:$0xf]
        %v1381 = vld [vmem:[#allocation10 + $0x7c] sm:$0xf]
        %v1382 = vld [vmem:[#allocation13 + $0x3] ss:$0 sm:$0xff]
        %v1415 = vunpack.c.l.b16 %v1350
        %v1416 = vunpack.c.l.b16 %v1351
        %v1417 = vunpack.c.l.b16 %v1352
        %v1418 = vunpack.c.l.b16 %v1353
        %v1419 = vunpack.c.l.b16 %v1354
        %v1420 = vunpack.c.l.b16 %v1355
        %v1421 = vunpack.c.l.b16 %v1356
        %v1422 = vunpack.c.l.b16 %v1357
        %v1423 = vunpack.c.l.b16 %v1358
        %v1424 = vunpack.c.l.b16 %v1359
        %v1425 = vunpack.c.l.b16 %v1360
        %v1426 = vunpack.c.l.b16 %v1361
        %v1427 = vunpack.c.l.b16 %v1362
        %v1428 = vunpack.c.l.b16 %v1363
        %v1429 = vunpack.c.l.b16 %v1364
        %v1430 = vunpack.c.l.b16 %v1365
        %v1431 = vunpack.c.l.b16 %v1366
        %v1432 = vunpack.c.l.b16 %v1367
        %v1433 = vunpack.c.l.b16 %v1368
        %v1434 = vunpack.c.l.b16 %v1369
        %v1435 = vunpack.c.l.b16 %v1370
        %v1436 = vunpack.c.l.b16 %v1371
        %v1437 = vunpack.c.l.b16 %v1372
        %v1438 = vunpack.c.l.b16 %v1373
        %v1439 = vunpack.c.l.b16 %v1374
        %v1440 = vunpack.c.l.b16 %v1375
        %v1441 = vunpack.c.l.b16 %v1376
        %v1442 = vunpack.c.l.b16 %v1377
        %v1443 = vunpack.c.l.b16 %v1378
        %v1444 = vunpack.c.l.b16 %v1379
        %v1445 = vunpack.c.l.b16 %v1380
        %v1446 = vunpack.c.l.b16 %v1381
        %v1447 = vpack.c.b16 %v1416, %v1415
        %v1448 = vpack.c.b16 %v1418, %v1417
        %v1449 = vpack.c.b16 %v1420, %v1419
        %v1450 = vpack.c.b16 %v1422, %v1421
        %v1451 = vpack.c.b16 %v1424, %v1423
        %v1452 = vpack.c.b16 %v1426, %v1425
        %v1453 = vpack.c.b16 %v1428, %v1427
        %v1454 = vpack.c.b16 %v1430, %v1429
        %v1455 = vpack.c.b16 %v1432, %v1431
        %v1456 = vpack.c.b16 %v1434, %v1433
        %v1457 = vpack.c.b16 %v1436, %v1435
        %v1458 = vpack.c.b16 %v1438, %v1437
        %v1459 = vpack.c.b16 %v1440, %v1439
        %v1460 = vpack.c.b16 %v1442, %v1441
        %v1461 = vpack.c.b16 %v1444, %v1443
        %v1462 = vpack.c.b16 %v1446, %v1445
        %1479 = vmatpush.bf16.msra.mxu0 %v1454
        %1480 = vmatpush.bf16.msra.mxu0 %v1453
        %1481 = vmatpush.bf16.msra.mxu0 %v1452
        %1482 = vmatpush.bf16.msra.mxu0 %v1451
        %1483 = vmatpush.bf16.msra.mxu0 %v1450
        %1484 = vmatpush.bf16.msra.mxu0 %v1449
        %1485 = vmatpush.bf16.msra.mxu0 %v1448
        %1486 = vmatpush.bf16.msra.mxu0 %v1447
        %1487 = vmatmul.bf16.gmra.mxu0 %v1318
        %v1488 = vpop.f32.mrf.mxu0
        %v1489 = vadd.f32 %v1382, %v1488
        %v1490 = vpop.f32.mrf.mxu0
        %v1491 = vadd.f32 %v1382, %v1490
        %1492 = vmatmul.bf16.gmra.mxu0 %v1320
        %v1493 = vpop.f32.mrf.mxu0
        %v1494 = vadd.f32 %v1382, %v1493
        %v1495 = vpop.f32.mrf.mxu0
        %v1496 = vadd.f32 %v1382, %v1495
        %1497 = vmatmul.bf16.gmra.mxu0 %v1322
        %v1498 = vpop.f32.mrf.mxu0
        %v1499 = vadd.f32 %v1382, %v1498
        %v1500 = vpop.f32.mrf.mxu0
        %v1501 = vadd.f32 %v1382, %v1500
        %1502 = vmatmul.bf16.gmra.mxu0 %v1324
        %v1503 = vpop.f32.mrf.mxu0
        %v1504 = vadd.f32 %v1382, %v1503
        %v1505 = vpop.f32.mrf.mxu0
        %v1506 = vadd.f32 %v1382, %v1505
        %1507 = vmatmul.bf16.gmra.mxu0 %v1326
        %v1508 = vpop.f32.mrf.mxu0
        %v1509 = vadd.f32 %v1382, %v1508
        %v1510 = vpop.f32.mrf.mxu0
        %v1511 = vadd.f32 %v1382, %v1510
        %1512 = vmatmul.bf16.gmra.mxu0 %v1328
        %v1513 = vpop.f32.mrf.mxu0
        %v1514 = vadd.f32 %v1382, %v1513
        %v1515 = vpop.f32.mrf.mxu0
        %v1516 = vadd.f32 %v1382, %v1515
        %1517 = vmatmul.bf16.gmra.mxu0 %v1330
        %v1518 = vpop.f32.mrf.mxu0
        %v1519 = vadd.f32 %v1382, %v1518
        %v1520 = vpop.f32.mrf.mxu0
        %v1521 = vadd.f32 %v1382, %v1520
        %1522 = vmatmul.bf16.gmra.mxu0 %v1332
        %v1523 = vpop.f32.mrf.mxu0
        %v1524 = vadd.f32 %v1382, %v1523
        %v1525 = vpop.f32.mrf.mxu0
        %v1526 = vadd.f32 %v1382, %v1525
        %1527 = vmatmul.bf16.gmra.mxu0 %v1334
        %v1528 = vpop.f32.mrf.mxu0
        %v1529 = vadd.f32 %v1382, %v1528
        %v1530 = vpop.f32.mrf.mxu0
        %v1531 = vadd.f32 %v1382, %v1530
        %1532 = vmatmul.bf16.gmra.mxu0 %v1336
        %v1533 = vpop.f32.mrf.mxu0
        %v1534 = vadd.f32 %v1382, %v1533
        %v1535 = vpop.f32.mrf.mxu0
        %v1536 = vadd.f32 %v1382, %v1535
        %1537 = vmatmul.bf16.gmra.mxu0 %v1338
        %v1538 = vpop.f32.mrf.mxu0
        %v1539 = vadd.f32 %v1382, %v1538
        %v1540 = vpop.f32.mrf.mxu0
        %v1541 = vadd.f32 %v1382, %v1540
        %1542 = vmatmul.bf16.gmra.mxu0 %v1340
        %v1543 = vpop.f32.mrf.mxu0
        %v1544 = vadd.f32 %v1382, %v1543
        %v1545 = vpop.f32.mrf.mxu0
        %v1546 = vadd.f32 %v1382, %v1545
        %1547 = vmatmul.bf16.gmra.mxu0 %v1342
        %v1548 = vpop.f32.mrf.mxu0
        %v1549 = vadd.f32 %v1382, %v1548
        %v1550 = vpop.f32.mrf.mxu0
        %v1551 = vadd.f32 %v1382, %v1550
        %1552 = vmatmul.bf16.gmra.mxu0 %v1344
        %v1553 = vpop.f32.mrf.mxu0
        %v1554 = vadd.f32 %v1382, %v1553
        %v1555 = vpop.f32.mrf.mxu0
        %v1556 = vadd.f32 %v1382, %v1555
        %1557 = vmatmul.bf16.gmra.mxu0 %v1346
        %v1558 = vpop.f32.mrf.mxu0
        %v1559 = vadd.f32 %v1382, %v1558
        %v1560 = vpop.f32.mrf.mxu0
        %v1561 = vadd.f32 %v1382, %v1560
        %1562 = vmatmul.bf16.gmra.mxu0 %v1348
        %v1563 = vpop.f32.mrf.mxu0
        %v1564 = vadd.f32 %v1382, %v1563
        %v1565 = vpop.f32.mrf.mxu0
        %v1566 = vadd.f32 %v1382, %v1565
        %1567 = vdwg.mxu0
        %1568 = vmatpush.bf16.msra.mxu0 %v1462
        %1569 = vmatpush.bf16.msra.mxu0 %v1461
        %1570 = vmatpush.bf16.msra.mxu0 %v1460
        %1571 = vmatpush.bf16.msra.mxu0 %v1459
        %1572 = vmatpush.bf16.msra.mxu0 %v1458
        %1573 = vmatpush.bf16.msra.mxu0 %v1457
        %1574 = vmatpush.bf16.msra.mxu0 %v1456
        %1575 = vmatpush.bf16.msra.mxu0 %v1455
        %1576 = vmatmul.bf16.gmra.mxu0 %v1319
        %v1577 = vpop.f32.mrf.mxu0
        %v1578 = vadd.f32 %v1489, %v1577
        %v1579 = vpop.f32.mrf.mxu0
        %v1580 = vadd.f32 %v1491, %v1579
        %1581 = vmatmul.bf16.gmra.mxu0 %v1321
        %v1582 = vpop.f32.mrf.mxu0
        %v1583 = vadd.f32 %v1494, %v1582
        %v1584 = vpop.f32.mrf.mxu0
        %v1585 = vadd.f32 %v1496, %v1584
        %1586 = vmatmul.bf16.gmra.mxu0 %v1323
        %v1587 = vpop.f32.mrf.mxu0
        %v1588 = vadd.f32 %v1499, %v1587
        %v1589 = vpop.f32.mrf.mxu0
        %v1590 = vadd.f32 %v1501, %v1589
        %1591 = vmatmul.bf16.gmra.mxu0 %v1325
        %v1592 = vpop.f32.mrf.mxu0
        %v1593 = vadd.f32 %v1504, %v1592
        %v1594 = vpop.f32.mrf.mxu0
        %v1595 = vadd.f32 %v1506, %v1594
        %1596 = vmatmul.bf16.gmra.mxu0 %v1327
        %v1597 = vpop.f32.mrf.mxu0
        %v1598 = vadd.f32 %v1509, %v1597
        %v1599 = vpop.f32.mrf.mxu0
        %v1600 = vadd.f32 %v1511, %v1599
        %1601 = vmatmul.bf16.gmra.mxu0 %v1329
        %v1602 = vpop.f32.mrf.mxu0
        %v1603 = vadd.f32 %v1514, %v1602
        %v1604 = vpop.f32.mrf.mxu0
        %v1605 = vadd.f32 %v1516, %v1604
        %1606 = vmatmul.bf16.gmra.mxu0 %v1331
        %v1607 = vpop.f32.mrf.mxu0
        %v1608 = vadd.f32 %v1519, %v1607
        %v1609 = vpop.f32.mrf.mxu0
        %v1610 = vadd.f32 %v1521, %v1609
        %1611 = vmatmul.bf16.gmra.mxu0 %v1333
        %v1612 = vpop.f32.mrf.mxu0
        %v1613 = vadd.f32 %v1524, %v1612
        %v1614 = vpop.f32.mrf.mxu0
        %v1615 = vadd.f32 %v1526, %v1614
        %1616 = vmatmul.bf16.gmra.mxu0 %v1335
        %v1617 = vpop.f32.mrf.mxu0
        %v1618 = vadd.f32 %v1529, %v1617
        %v1619 = vpop.f32.mrf.mxu0
        %v1620 = vadd.f32 %v1531, %v1619
        %1621 = vmatmul.bf16.gmra.mxu0 %v1337
        %v1622 = vpop.f32.mrf.mxu0
        %v1623 = vadd.f32 %v1534, %v1622
        %v1624 = vpop.f32.mrf.mxu0
        %v1625 = vadd.f32 %v1536, %v1624
        %1626 = vmatmul.bf16.gmra.mxu0 %v1339
        %v1627 = vpop.f32.mrf.mxu0
        %v1628 = vadd.f32 %v1539, %v1627
        %v1629 = vpop.f32.mrf.mxu0
        %v1630 = vadd.f32 %v1541, %v1629
        %1631 = vmatmul.bf16.gmra.mxu0 %v1341
        %v1632 = vpop.f32.mrf.mxu0
        %v1633 = vadd.f32 %v1544, %v1632
        %v1634 = vpop.f32.mrf.mxu0
        %v1635 = vadd.f32 %v1546, %v1634
        %1636 = vmatmul.bf16.gmra.mxu0 %v1343
        %v1637 = vpop.f32.mrf.mxu0
        %v1638 = vadd.f32 %v1549, %v1637
        %v1639 = vpop.f32.mrf.mxu0
        %v1640 = vadd.f32 %v1551, %v1639
        %1641 = vmatmul.bf16.gmra.mxu0 %v1345
        %v1642 = vpop.f32.mrf.mxu0
        %v1643 = vadd.f32 %v1554, %v1642
        %v1644 = vpop.f32.mrf.mxu0
        %v1645 = vadd.f32 %v1556, %v1644
        %1646 = vmatmul.bf16.gmra.mxu0 %v1347
        %v1647 = vpop.f32.mrf.mxu0
        %v1648 = vadd.f32 %v1559, %v1647
        %v1649 = vpop.f32.mrf.mxu0
        %v1650 = vadd.f32 %v1561, %v1649
        %1651 = vmatmul.bf16.gmra.mxu0 %v1349
        %v1652 = vpop.f32.mrf.mxu0
        %v1653 = vadd.f32 %v1564, %v1652
        %v1654 = vpop.f32.mrf.mxu0
        %v1655 = vadd.f32 %v1566, %v1654
        %1656 = vdwg.mxu0
        %v1657 = vmax.f32 %v1578, 0.0
        %v1658 = vmax.f32 %v1580, 0.0
        %v1659 = vmax.f32 %v1583, 0.0
        %v1660 = vmax.f32 %v1585, 0.0
        %v1661 = vmax.f32 %v1588, 0.0
        %v1662 = vmax.f32 %v1590, 0.0
        %v1663 = vmax.f32 %v1593, 0.0
        %v1664 = vmax.f32 %v1595, 0.0
        %v1665 = vmax.f32 %v1598, 0.0
        %v1666 = vmax.f32 %v1600, 0.0
        %v1667 = vmax.f32 %v1603, 0.0
        %v1668 = vmax.f32 %v1605, 0.0
        %v1669 = vmax.f32 %v1608, 0.0
        %v1670 = vmax.f32 %v1610, 0.0
        %v1671 = vmax.f32 %v1613, 0.0
        %v1672 = vmax.f32 %v1615, 0.0
        %v1673 = vmax.f32 %v1618, 0.0
        %v1674 = vmax.f32 %v1620, 0.0
        %v1675 = vmax.f32 %v1623, 0.0
        %v1676 = vmax.f32 %v1625, 0.0
        %v1677 = vmax.f32 %v1628, 0.0
        %v1678 = vmax.f32 %v1630, 0.0
        %v1679 = vmax.f32 %v1633, 0.0
        %v1680 = vmax.f32 %v1635, 0.0
        %v1681 = vmax.f32 %v1638, 0.0
        %v1682 = vmax.f32 %v1640, 0.0
        %v1683 = vmax.f32 %v1643, 0.0
        %v1684 = vmax.f32 %v1645, 0.0
        %v1685 = vmax.f32 %v1648, 0.0
        %v1686 = vmax.f32 %v1650, 0.0
        %v1687 = vmax.f32 %v1653, 0.0
        %v1688 = vmax.f32 %v1655, 0.0
        %v1689 = vld [vmem:[#allocation11] sm:$0xf]
        %v1690 = vld [vmem:[#allocation11 + $0x4] sm:$0xf]
        %v1691 = vld [vmem:[#allocation11 + $0x8] sm:$0xf]
        %v1692 = vld [vmem:[#allocation11 + $0xc] sm:$0xf]
        %v1693 = vld [vmem:[#allocation11 + $0x10] sm:$0xf]
        %v1694 = vld [vmem:[#allocation11 + $0x14] sm:$0xf]
        %v1695 = vld [vmem:[#allocation11 + $0x18] sm:$0xf]
        %v1696 = vld [vmem:[#allocation11 + $0x1c] sm:$0xf]
        %v1697 = vld [vmem:[#allocation11 + $0x20] sm:$0xf]
        %v1698 = vld [vmem:[#allocation11 + $0x24] sm:$0xf]
        %v1699 = vld [vmem:[#allocation11 + $0x28] sm:$0xf]
        %v1700 = vld [vmem:[#allocation11 + $0x2c] sm:$0xf]
        %v1701 = vld [vmem:[#allocation11 + $0x30] sm:$0xf]
        %v1702 = vld [vmem:[#allocation11 + $0x34] sm:$0xf]
        %v1703 = vld [vmem:[#allocation11 + $0x38] sm:$0xf]
        %v1704 = vld [vmem:[#allocation11 + $0x3c] sm:$0xf]
        %v1721 = vunpack.c.l.b16 %v1689
        %v1722 = vunpack.c.l.b16 %v1690
        %v1723 = vunpack.c.l.b16 %v1691
        %v1724 = vunpack.c.l.b16 %v1692
        %v1725 = vunpack.c.l.b16 %v1693
        %v1726 = vunpack.c.l.b16 %v1694
        %v1727 = vunpack.c.l.b16 %v1695
        %v1728 = vunpack.c.l.b16 %v1696
        %v1729 = vunpack.c.l.b16 %v1697
        %v1730 = vunpack.c.l.b16 %v1698
        %v1731 = vunpack.c.l.b16 %v1699
        %v1732 = vunpack.c.l.b16 %v1700
        %v1733 = vunpack.c.l.b16 %v1701
        %v1734 = vunpack.c.l.b16 %v1702
        %v1735 = vunpack.c.l.b16 %v1703
        %v1736 = vunpack.c.l.b16 %v1704
        %v1737 = vpack.c.b16 %v1722, %v1721
        %v1738 = vpack.c.b16 %v1724, %v1723
        %v1739 = vpack.c.b16 %v1726, %v1725
        %v1740 = vpack.c.b16 %v1728, %v1727
        %v1741 = vpack.c.b16 %v1730, %v1729
        %v1742 = vpack.c.b16 %v1732, %v1731
        %v1743 = vpack.c.b16 %v1734, %v1733
        %v1744 = vpack.c.b16 %v1736, %v1735
        %1753 = vmatpush.bf16.msra.mxu0 %v1744
        %1754 = vmatpush.bf16.msra.mxu0 %v1743
        %1755 = vmatpush.bf16.msra.mxu0 %v1742
        %1756 = vmatpush.bf16.msra.mxu0 %v1741
        %1757 = vmatpush.bf16.msra.mxu0 %v1740
        %1758 = vmatpush.bf16.msra.mxu0 %v1739
        %1759 = vmatpush.bf16.msra.mxu0 %v1738
        %1760 = vmatpush.bf16.msra.mxu0 %v1737
        %1761 = vmatmul.bf16.gmra.mxu0 %v538
        %v1762 = vpop.f32.mrf.mxu0
        %v1763 = vadd.f32 0.0, %v1762
        %v1764 = vpop.f32.mrf.mxu0
        %v1765 = vadd.f32 0.0, %v1764
        %1766 = vmatmul.bf16.gmra.mxu0 %v539
        %v1767 = vpop.f32.mrf.mxu0
        %v1768 = vadd.f32 0.0, %v1767
        %v1769 = vpop.f32.mrf.mxu0
        %v1770 = vadd.f32 0.0, %v1769
        %1771 = vmatmul.bf16.gmra.mxu0 %v540
        %v1772 = vpop.f32.mrf.mxu0
        %v1773 = vadd.f32 0.0, %v1772
        %v1774 = vpop.f32.mrf.mxu0
        %v1775 = vadd.f32 0.0, %v1774
        %1776 = vmatmul.bf16.gmra.mxu0 %v541
        %v1777 = vpop.f32.mrf.mxu0
        %v1778 = vadd.f32 0.0, %v1777
        %v1779 = vpop.f32.mrf.mxu0
        %v1780 = vadd.f32 0.0, %v1779
        %1781 = vmatmul.bf16.gmra.mxu0 %v542
        %v1782 = vpop.f32.mrf.mxu0
        %v1783 = vadd.f32 0.0, %v1782
        %v1784 = vpop.f32.mrf.mxu0
        %v1785 = vadd.f32 0.0, %v1784
        %1786 = vmatmul.bf16.gmra.mxu0 %v543
        %v1787 = vpop.f32.mrf.mxu0
        %v1788 = vadd.f32 0.0, %v1787
        %v1789 = vpop.f32.mrf.mxu0
        %v1790 = vadd.f32 0.0, %v1789
        %1791 = vmatmul.bf16.gmra.mxu0 %v544
        %v1792 = vpop.f32.mrf.mxu0
        %v1793 = vadd.f32 0.0, %v1792
        %v1794 = vpop.f32.mrf.mxu0
        %v1795 = vadd.f32 0.0, %v1794
        %1796 = vmatmul.bf16.gmra.mxu0 %v545
        %v1797 = vpop.f32.mrf.mxu0
        %v1798 = vadd.f32 0.0, %v1797
        %v1799 = vpop.f32.mrf.mxu0
        %v1800 = vadd.f32 0.0, %v1799
        %1801 = vmatmul.bf16.gmra.mxu0 %v546
        %v1802 = vpop.f32.mrf.mxu0
        %v1803 = vadd.f32 0.0, %v1802
        %v1804 = vpop.f32.mrf.mxu0
        %v1805 = vadd.f32 0.0, %v1804
        %1806 = vmatmul.bf16.gmra.mxu0 %v547
        %v1807 = vpop.f32.mrf.mxu0
        %v1808 = vadd.f32 0.0, %v1807
        %v1809 = vpop.f32.mrf.mxu0
        %v1810 = vadd.f32 0.0, %v1809
        %1811 = vmatmul.bf16.gmra.mxu0 %v548
        %v1812 = vpop.f32.mrf.mxu0
        %v1813 = vadd.f32 0.0, %v1812
        %v1814 = vpop.f32.mrf.mxu0
        %v1815 = vadd.f32 0.0, %v1814
        %1816 = vmatmul.bf16.gmra.mxu0 %v549
        %v1817 = vpop.f32.mrf.mxu0
        %v1818 = vadd.f32 0.0, %v1817
        %v1819 = vpop.f32.mrf.mxu0
        %v1820 = vadd.f32 0.0, %v1819
        %1821 = vmatmul.bf16.gmra.mxu0 %v550
        %v1822 = vpop.f32.mrf.mxu0
        %v1823 = vadd.f32 0.0, %v1822
        %v1824 = vpop.f32.mrf.mxu0
        %v1825 = vadd.f32 0.0, %v1824
        %1826 = vmatmul.bf16.gmra.mxu0 %v551
        %v1827 = vpop.f32.mrf.mxu0
        %v1828 = vadd.f32 0.0, %v1827
        %v1829 = vpop.f32.mrf.mxu0
        %v1830 = vadd.f32 0.0, %v1829
        %1831 = vmatmul.bf16.gmra.mxu0 %v552
        %v1832 = vpop.f32.mrf.mxu0
        %v1833 = vadd.f32 0.0, %v1832
        %v1834 = vpop.f32.mrf.mxu0
        %v1835 = vadd.f32 0.0, %v1834
        %1836 = vmatmul.bf16.gmra.mxu0 %v553
        %v1837 = vpop.f32.mrf.mxu0
        %v1838 = vadd.f32 0.0, %v1837
        %v1839 = vpop.f32.mrf.mxu0
        %v1840 = vadd.f32 0.0, %v1839
        %1841 = vdwg.mxu0
        %v1842 = vadd.f32 %v1657, %v1763
        %v1843 = vadd.f32 %v1658, %v1765
        %v1844 = vadd.f32 %v1659, %v1768
        %v1845 = vadd.f32 %v1660, %v1770
        %v1846 = vadd.f32 %v1661, %v1773
        %v1847 = vadd.f32 %v1662, %v1775
        %v1848 = vadd.f32 %v1663, %v1778
        %v1849 = vadd.f32 %v1664, %v1780
        %v1850 = vadd.f32 %v1665, %v1783
        %v1851 = vadd.f32 %v1666, %v1785
        %v1852 = vadd.f32 %v1667, %v1788
        %v1853 = vadd.f32 %v1668, %v1790
        %v1854 = vadd.f32 %v1669, %v1793
        %v1855 = vadd.f32 %v1670, %v1795
        %v1856 = vadd.f32 %v1671, %v1798
        %v1857 = vadd.f32 %v1672, %v1800
        %v1858 = vadd.f32 %v1673, %v1803
        %v1859 = vadd.f32 %v1674, %v1805
        %v1860 = vadd.f32 %v1675, %v1808
        %v1861 = vadd.f32 %v1676, %v1810
        %v1862 = vadd.f32 %v1677, %v1813
        %v1863 = vadd.f32 %v1678, %v1815
        %v1864 = vadd.f32 %v1679, %v1818
        %v1865 = vadd.f32 %v1680, %v1820
        %v1866 = vadd.f32 %v1681, %v1823
        %v1867 = vadd.f32 %v1682, %v1825
        %v1868 = vadd.f32 %v1683, %v1828
        %v1869 = vadd.f32 %v1684, %v1830
        %v1870 = vadd.f32 %v1685, %v1833
        %v1871 = vadd.f32 %v1686, %v1835
        %v1872 = vadd.f32 %v1687, %v1838
        %v1873 = vadd.f32 %v1688, %v1840
        %v1874 = vld [vmem:[#allocation13 + $0x4] ss:$0 sm:$0xff]
        %v1875 = vadd.f32 %v1842, %v1874
        %v1876 = vadd.f32 %v1843, %v1874
        %v1877 = vadd.f32 %v1844, %v1874
        %v1878 = vadd.f32 %v1845, %v1874
        %v1879 = vadd.f32 %v1846, %v1874
        %v1880 = vadd.f32 %v1847, %v1874
        %v1881 = vadd.f32 %v1848, %v1874
        %v1882 = vadd.f32 %v1849, %v1874
        %v1883 = vadd.f32 %v1850, %v1874
        %v1884 = vadd.f32 %v1851, %v1874
        %v1885 = vadd.f32 %v1852, %v1874
        %v1886 = vadd.f32 %v1853, %v1874
        %v1887 = vadd.f32 %v1854, %v1874
        %v1888 = vadd.f32 %v1855, %v1874
        %v1889 = vadd.f32 %v1856, %v1874
        %v1890 = vadd.f32 %v1857, %v1874
        %v1891 = vadd.f32 %v1858, %v1874
        %v1892 = vadd.f32 %v1859, %v1874
        %v1893 = vadd.f32 %v1860, %v1874
        %v1894 = vadd.f32 %v1861, %v1874
        %v1895 = vadd.f32 %v1862, %v1874
        %v1896 = vadd.f32 %v1863, %v1874
        %v1897 = vadd.f32 %v1864, %v1874
        %v1898 = vadd.f32 %v1865, %v1874
        %v1899 = vadd.f32 %v1866, %v1874
        %v1900 = vadd.f32 %v1867, %v1874
        %v1901 = vadd.f32 %v1868, %v1874
        %v1902 = vadd.f32 %v1869, %v1874
        %v1903 = vadd.f32 %v1870, %v1874
        %v1904 = vadd.f32 %v1871, %v1874
        %v1905 = vadd.f32 %v1872, %v1874
        %v1906 = vadd.f32 %v1873, %v1874
        %v1907 = vpack.c.bf16 %v1876, %v1875
        %v1908 = vpack.c.bf16 %v1878, %v1877
        %v1909 = vpack.c.bf16 %v1880, %v1879
        %v1910 = vpack.c.bf16 %v1882, %v1881
        %v1911 = vpack.c.bf16 %v1884, %v1883
        %v1912 = vpack.c.bf16 %v1886, %v1885
        %v1913 = vpack.c.bf16 %v1888, %v1887
        %v1914 = vpack.c.bf16 %v1890, %v1889
        %v1915 = vpack.c.bf16 %v1892, %v1891
        %v1916 = vpack.c.bf16 %v1894, %v1893
        %v1917 = vpack.c.bf16 %v1896, %v1895
        %v1918 = vpack.c.bf16 %v1898, %v1897
        %v1919 = vpack.c.bf16 %v1900, %v1899
        %v1920 = vpack.c.bf16 %v1902, %v1901
        %v1921 = vpack.c.bf16 %v1904, %v1903
        %v1922 = vpack.c.bf16 %v1906, %v1905
        %v1923 = vld [vmem:[%s6] sm:$0x1]
        %v1924 = vld [vmem:[#allocation13 + $0x5] ss:$0 sm:$0xff]
        %1926 = vset.pattern.permute.xlu0 0
        %1927 = vperm.xlu0 %1926, %v1924
        %v1928 = vpop.permute.xlu0 %1927
        %1930 = vmatpush.bf16.xpose.msra.mxu0 %v1914
        %1931 = vmatpush.bf16.xpose.msra.mxu0 %v1913
        %1932 = vmatpush.bf16.xpose.msra.mxu0 %v1912
        %1933 = vmatpush.bf16.xpose.msra.mxu0 %v1911
        %1934 = vmatpush.bf16.xpose.msra.mxu0 %v1910
        %1935 = vmatpush.bf16.xpose.msra.mxu0 %v1909
        %1936 = vmatpush.bf16.xpose.msra.mxu0 %v1908
        %1937 = vmatpush.bf16.xpose.msra.mxu0 %v1907
        %1938 = vmatmul.bf16.gmra.mxu0 %v1923
        %v1939 = vpop.f32.mrf.mxu0
        %v1940 = vadd.f32 %v1928, %v1939
        %v1941 = vpop.f32.mrf.mxu0
        %1942 = vdwg.mxu0
        %1943 = vmatpush.bf16.xpose.msra.mxu0 %v1922
        %1944 = vmatpush.bf16.xpose.msra.mxu0 %v1921
        %1945 = vmatpush.bf16.xpose.msra.mxu0 %v1920
        %1946 = vmatpush.bf16.xpose.msra.mxu0 %v1919
        %1947 = vmatpush.bf16.xpose.msra.mxu0 %v1918
        %1948 = vmatpush.bf16.xpose.msra.mxu0 %v1917
        %1949 = vmatpush.bf16.xpose.msra.mxu0 %v1916
        %1950 = vmatpush.bf16.xpose.msra.mxu0 %v1915
        %1951 = vmatmul.bf16.gmra.mxu0 %v1923
        %v1952 = vpop.f32.mrf.mxu0
        %v1953 = vadd.f32 %v1928, %v1952
        %v1954 = vpop.f32.mrf.mxu0
        %1955 = vdwg.mxu0
        %v1956 = vxor.u32 %v1940, 2147483648
        %v1957 = vxor.u32 %v1953, 2147483648
        %v1958 = vmul.f32 %v1956, 1.442695
        %v1959 = vpow.pop %v1958
        %v1960 = vmul.f32 %v1957, 1.442695
        %v1961 = vpow.pop %v1960
        %v1962 = vadd.f32 %v1959, 1.0
        %v1963 = vadd.f32 %v1961, 1.0
        %v1964 = vrcp.pop %v1962
        %v1965 = vmul.f32 %v1962, %v1964
        %v1966 = vsub.f32 1.0, %v1965
        %v1967 = vmul.f32 %v1964, %v1966
        %v1968 = vadd.f32 %v1964, %v1967
        %vm1969 = vweird.f32 %v1962
        %vm1970 = vweird.f32 %v1964
        %vm1971 = vmor %vm1969, %vm1970
        %v1972 = vsel %vm1971, %v1964, %v1968
        %v1973 = vand.u32 2147483647, %v1962
        %vm1974 = vcmp.eq.f32.partialorder %v1973, 8.507059e+37
        %v1975 = vand.u32 %v1962, 2147483648
        %v1976 = vor.u32 1.1754944e-38, %v1975
        %v1977 = vsel %vm1974, %v1976, %v1972
        %v1978 = vmul.f32 1.0, %v1977
        %v1979 = vrcp.pop %v1963
        %v1980 = vmul.f32 %v1963, %v1979
        %v1981 = vsub.f32 1.0, %v1980
        %v1982 = vmul.f32 %v1979, %v1981
        %v1983 = vadd.f32 %v1979, %v1982
        %vm1984 = vweird.f32 %v1963
        %vm1985 = vweird.f32 %v1979
        %vm1986 = vmor %vm1984, %vm1985
        %v1987 = vsel %vm1986, %v1979, %v1983
        %v1988 = vand.u32 2147483647, %v1963
        %vm1989 = vcmp.eq.f32.partialorder %v1988, 8.507059e+37
        %v1990 = vand.u32 %v1963, 2147483648
        %v1991 = vor.u32 1.1754944e-38, %v1990
        %v1992 = vsel %vm1989, %v1991, %v1987
        %v1993 = vmul.f32 1.0, %v1992
        %v1996 = vrot.slane %v1993, 7
        %vm1997 = vcmask 1040384
        %v1998 = vsel %vm1997, %v1978, %v1996
        %v2000 = vlaneseq
        %vm2001 = vcmp.ge.s32.totalorder %v2000, 0
        %vm2002 = vcmp.lt.s32.totalorder %v2000, 256
        %vm2003 = vmand %vm2001, %vm2002
        %2004 = vst.msk [vmem:[%s422] sm:$0x3] %vm2003, %v1998
        %s2005 = sand.u32 %s209, 1
        %s2006 = scalar_lea.sflag [#allocation4], %s2005
        %s2007 = sand.u32 %s209, 1
        %s2008 = smul.addr %s2007, 2
        %s2009 = scalar_lea.vmem [#allocation14], %s2008
        // Predicated region
        $region81: #{tpu_custom_call.1} parent=51 // pred_check
          %p2010 = pneg %p219
        $region82: #{tpu_custom_call.1} parent=51 // pred_check_branch
          %2012 = sbr.rel (%p2010) target = $region84
        $region83: #{tpu_custom_call.1} parent=51 // pred_region
          %s2013 = smul.u32 2, %s28
          %2015 = vsyncadd %s2006, 0
          %s2016 = scalar_lea.hbm %s8, %s2013
          %s2018 = sshll.u32 %s2009, 4
          %s2019 = int_to_ptr.vmem [resolvable:$true] %s2018
          %s2020 = sshll.u32 %s2016, 4
          %s2021 = int_to_ptr.hbm [resolvable:$true] %s2020
          %2023 = dma.vmem_to_hbm [thread:$0]  %s2019, 32, %s2021, %s2006
        $region84: #{tpu_custom_call.1} parent=51 // pred_fallthru
          _
      $region52: #{tpu_custom_call.1} parent=5 // pred_fallthru
        _
      %p2024 = scmp.le.s32.totalorder 2, %s23
      // Predicated region
      $region85: #{tpu_custom_call.1} parent=5 // pred_check
        %p2025 = pneg %p2024
      $region86: #{tpu_custom_call.1} parent=5 // pred_check_branch
        %2027 = sbr.rel (%p2025) target = $region88
      $region87: #{tpu_custom_call.1} parent=5 // pred_region
        %s2028 = ssub.s32 %s23, 2
        // Predicated region
        $region89: #{tpu_custom_call.1} parent=87 // pred_check
          %p2029 = pneg %p225
        $region90: #{tpu_custom_call.1} parent=87 // pred_check_branch
          %2031 = sbr.rel (%p2029) target = $region92
        $region91: #{tpu_custom_call.1} parent=87 // pred_region
          %s2032 = sand.u32 %s210, 1
          %s2033 = scalar_lea.sflag [#allocation4], %s2032
          %s2034 = sand.u32 %s210, 1
          %s2035 = smul.addr %s2034, 2
          %s2036 = scalar_lea.vmem [#allocation14], %s2035
          %2038 = dma.done %s2033, 32
        $region92: #{tpu_custom_call.1} parent=87 // pred_fallthru
          _
      $region88: #{tpu_custom_call.1} parent=5 // pred_fallthru
        _
    $region6: #{tpu_custom_call.1} parent=1 // loop_footer
      %s27 = sadd.s32 1, %s23
    $region7: #{tpu_custom_call.1} parent=1 // loop_footer_branch
      %22 = sbr.rel target = $region3
    $region8: #{tpu_custom_call.1} parent=1 // loop_exit
      _
    %2039 = vsyncpa [#allocation3], 1
    %s2040 = scalar_lea.sflag [#allocation3], 1
    %2041 = vsyncpa %s2040, 1
    %2042 = vsyncpa [#allocation6], 1
    %2043 = vsyncpa [#allocation9], 1
    %2044 = vsyncpa [#allocation12], 1
    %2045 = vsyncpa [#allocation4], 1
    %s2046 = scalar_lea.sflag [#allocation4], 1
    %2047 = vsyncpa %s2046, 1

</llo_original>
